<compile_context>
chip_gen: v7x
topology: tpu7x:2x2x1
jax: 0.10.0
libtpu: 0.0.40
codegen_flags: <defaults>
</compile_context>

<pallas_src>
import functools
import math

import jax
import jax.numpy as jnp
from jax import lax
from jax.experimental import pallas as pl
from jax.experimental.pallas import tpu as pltpu


# Explicit scoped-VMEM budget (well above actual use, safe on v5e/v6e/v7x).
_VMEM_LIMIT = 32 * 1024 * 1024


def _seq_attn_kernel(scale,
                     q_ref, k_ref, v_ref, mask_ref,
                     out_ref,
                     m_scr, l_scr, acc_scr):
    """Flash-style adaptive-span attention, streamed over the key length L.

    grid = (B*K, M_tiles, L_tiles); the L axis is "arbitrary" (reduction).

    q_ref    : (1, TM, D) bf16   queries for this (head, M-tile)
    k_ref    : (1, TL, D) bf16   keys for this L tile
    v_ref    : (1, TL, D) bf16   values for this L tile
    mask_ref : (1, 1, TL) f32    adaptive-span soft mask tile (post-softmax)
    out_ref  : (1, TM, D) f32    attention output
    m/l/acc  : running max / running sum-exp / PV accumulator (f32 scratch)
    """
    li = pl.program_id(2)

    @pl.when(li == 0)
    def _():
        m_scr[...] = jnp.full(m_scr.shape, -jnp.inf, dtype=m_scr.dtype)
        l_scr[...] = jnp.zeros(l_scr.shape, dtype=l_scr.dtype)
        acc_scr[...] = jnp.zeros(acc_scr.shape, dtype=acc_scr.dtype)

    q = q_ref[0]                                      # (TM, D) bf16
    k = k_ref[0]                                      # (TL, D) bf16
    v = v_ref[0]                                      # (TL, D) bf16

    # (TM, D) x (TL, D)^T -> (TM, TL) scores, f32 MXU accumulation.  The scale
    # is applied to the f32 scores (not folded into bf16 q) so exp() sees
    # exactly the reference values.
    s = lax.dot_general(q, k, (((1,), (1,)), ((), ())),
                        preferred_element_type=jnp.float32) * scale

    m_prev = m_scr[...]                               # (TM, 1)
    m_new = jnp.maximum(m_prev, jnp.max(s, axis=-1, keepdims=True))
    alpha = jnp.exp(m_prev - m_new)
    p = jnp.exp(s - m_new)                            # (TM, TL) unmasked probabilities
    # Post-softmax mask: unmasked denominator, masked numerator == softmax(s)*mask @ v.
    l_scr[...] = alpha * l_scr[...] + jnp.sum(p, axis=-1, keepdims=True)
    pm = (p * mask_ref[0]).astype(jnp.bfloat16)       # (TM, TL)
    acc_scr[...] = alpha * acc_scr[...] + jnp.dot(pm, v,
                                                  preferred_element_type=jnp.float32)
    m_scr[...] = m_new

    @pl.when(li == pl.num_programs(2) - 1)
    def _():
        # Exact f32 divide (review correctness item: no approx reciprocal).
        out_ref[0] = (acc_scr[...] / l_scr[...]).astype(out_ref.dtype)


def make_adaptive_mask(current_val, max_size, ramp_size, L):
    """AdaptiveMask.forward mask computation (parameter-derived, tiny -> JAX glue).

    current_val: (K, 1, 1) -> returns (K, 1, L).
    """
    template = jnp.linspace(1.0 - max_size, 0.0, max_size)           # (max_size,)
    m = template[None, None, :] + current_val * max_size             # (K, 1, max_size)
    m = m / ramp_size + 1.0
    m = jnp.clip(m, 0.0, 1.0)
    # TODO(synk): AdaptiveMask.attn_span side buffer (count_nonzero) not reproduced.
    if L < max_size:
        m = m[:, :, -L:]
    elif L > max_size:
        raise ValueError("key length exceeds attn_span (reference broadcast would fail)")
    return m


def seq_attention(query, key, value, mask, *, hidden_size, tm=128, tl=256):
    """SeqAttention.forward: (softmax(q k^T / sqrt(hidden_size)) * mask) @ v."""
    BK, M, D = query.shape
    L = key.shape[1]
    Kmask = mask.shape[0]
    assert key.shape == (BK, L, D) and value.shape == (BK, L, D)
    assert mask.shape == (Kmask, 1, L) and Kmask in (1, BK), \
        "AdaptiveMask broadcast requires batch == 1 (or a single head)"

    tm = min(tm, M)
    tl = min(tl, L)
    assert M % tm == 0 and L % tl == 0, "demo shapes must tile evenly"

    if Kmask == BK:
        mask_map = lambda b, i, l: (b, 0, l)
    else:
        mask_map = lambda b, i, l: (0, 0, l)

    kernel = functools.partial(_seq_attn_kernel, 1.0 / math.sqrt(hidden_size))
    return pl.pallas_call(
        kernel,
        out_shape=jax.ShapeDtypeStruct((BK, M, D), jnp.float32),
        grid=(BK, M // tm, L // tl),
        in_specs=[
            pl.BlockSpec((1, tm, D), lambda b, i, l: (b, i, 0)),
            pl.BlockSpec((1, tl, D), lambda b, i, l: (b, l, 0)),
            pl.BlockSpec((1, tl, D), lambda b, i, l: (b, l, 0)),
            pl.BlockSpec((1, 1, tl), mask_map),
        ],
        out_specs=pl.BlockSpec((1, tm, D), lambda b, i, l: (b, i, 0)),
        scratch_shapes=[
            pltpu.VMEM((tm, 1), jnp.float32),    # running max
            pltpu.VMEM((tm, 1), jnp.float32),    # running sum-exp (unmasked)
            pltpu.VMEM((tm, D), jnp.float32),    # PV accumulator (lane-aligned)
        ],
        compiler_params=pltpu.CompilerParams(
            dimension_semantics=("parallel", "parallel", "arbitrary"),
            vmem_limit_bytes=_VMEM_LIMIT),
    )(query.astype(jnp.bfloat16), key.astype(jnp.bfloat16),
      value.astype(jnp.bfloat16), mask.astype(jnp.float32))


# Pure-JAX reference (PyTorch op order; bf16 matmul operands / f32 accumulation
# like the kernel so the comparison tolerance stays tight).
def reference_seq_attention(query, key, value, mask, hidden_size):
    qb = query.astype(jnp.bfloat16)
    kb = key.astype(jnp.bfloat16)
    vb = value.astype(jnp.bfloat16)
    s = jnp.einsum("bmd,bld->bml", qb, kb,
                   preferred_element_type=jnp.float32) / math.sqrt(hidden_size)
    attn = jax.nn.softmax(s, axis=-1)
    attn = attn * mask                                    # post-softmax adaptive mask
    out = jnp.einsum("bml,bld->bmd", attn.astype(jnp.bfloat16), vb,
                     preferred_element_type=jnp.float32)
    return out


if __name__ == "__main__":
    # Config: D = hidden_size // num_attention_heads = 128 -> per-head feature
    # axis is exactly one lane tile; scale uses hidden_size (faithful).
    cfg = dict(
        hidden_size=512,
        num_attention_heads=4,
        attn_span=512,
        adapt_span_ramp=64,
        adapt_span_init="random",
        dropout=0.0,          # nn.Dropout is never applied in SeqAttention.forward
    )
    K = cfg["num_attention_heads"]
    D = cfg["hidden_size"] // K
    B, M = 1, 256             # B must be 1 for the reference mask broadcast
    L = cfg["attn_span"]      # cache (L - M) + current block (M)

    root = jax.random.PRNGKey(0)
    kq, kk, kv, ks = jax.random.split(root, 4)
    query = 0.5 * jax.random.normal(kq, (B * K, M, D), jnp.float32)
    key = 0.5 * jax.random.normal(kk, (B * K, L, D), jnp.float32)
    value = jax.random.normal(kv, (B * K, L, D), jnp.float32)
    # AdaptiveMask.current_val with init_val='random' -> uniform [0, 1), one per head.
    span_val = jax.random.uniform(ks, (K, 1, 1), jnp.float32)

    mask = make_adaptive_mask(span_val, cfg["attn_span"], cfg["adapt_span_ramp"], L)

    out = seq_attention(query, key, value, mask, hidden_size=cfg["hidden_size"])
    out = jax.block_until_ready(out)

    ref = reference_seq_attention(query, key, value, mask, cfg["hidden_size"])
    assert out.shape == (B * K, M, D)
    err = float(jnp.max(jnp.abs(out - ref)))
    assert jnp.allclose(out, ref, atol=2e-2, rtol=2e-2), \
        f"mismatch vs pure-JAX reference (max abs err {err})"

    print("KERNEL_OK")
</pallas_src>

<mosaic_0001>
module attributes {stable_mosaic.version = 11 : i64} {
  func.func @_seq_attn_kernel(%arg0: i32, %arg1: i32, %arg2: i32, %arg3: memref<1x128x128xbf16, #tpu.memory_space<vmem>>, %arg4: memref<1x256x128xbf16, #tpu.memory_space<vmem>>, %arg5: memref<1x256x128xbf16, #tpu.memory_space<vmem>>, %arg6: memref<1x1x256xf32, #tpu.memory_space<vmem>>, %arg7: memref<1x128x128xf32, #tpu.memory_space<vmem>>, %arg8: memref<128x1xf32, #tpu.memory_space<vmem>>, %arg9: memref<128x1xf32, #tpu.memory_space<vmem>>, %arg10: memref<128x128xf32, #tpu.memory_space<vmem>>) attributes {dimension_semantics = [#tpu.dimension_semantics<parallel>, #tpu.dimension_semantics<parallel>, #tpu.dimension_semantics<arbitrary>], iteration_bounds = array<i64: 4, 2, 2>, scalar_prefetch = 0 : i64, scratch_operands = 3 : i64, tpu.core_type = #tpu.core_type<tc>, window_params = [{transform_indices = @transform_0, window_bounds = array<i64: 1, 128, 128>}, {transform_indices = @transform_1, window_bounds = array<i64: 1, 256, 128>}, {transform_indices = @transform_2, window_bounds = array<i64: 1, 256, 128>}, {transform_indices = @transform_3, window_bounds = array<i64: 1, 1, 256>}, {transform_indices = @transform_4, window_bounds = array<i64: 1, 128, 128>}]} {
    %c0_i32 = arith.constant 0 : i32
    %0 = arith.cmpi eq, %arg2, %c0_i32 : i32
    %1 = arith.extui %0 : i1 to i32
    %c0_i32_0 = arith.constant 0 : i32
    %2 = arith.cmpi ne, %1, %c0_i32_0 : i32
    scf.if %2 {
      %cst_29 = arith.constant 0xFF800000 : f32
      %42 = vector.broadcast %cst_29 : f32 to vector<128x1xf32>
      %c0_30 = arith.constant 0 : index
      %c0_31 = arith.constant 0 : index
      %43 = vector.load %arg8[%c0_30, %c0_31] : memref<128x1xf32, #tpu.memory_space<vmem>>, vector<128x1xf32>
      tpu.vector_store %arg8[%c0_30, %c0_31], %42 {strides = array<i32>} : memref<128x1xf32, #tpu.memory_space<vmem>>, vector<128x1xf32>,
      %cst_32 = arith.constant 0.000000e+00 : f32
      %44 = vector.broadcast %cst_32 : f32 to vector<128x1xf32>
      %c0_33 = arith.constant 0 : index
      %c0_34 = arith.constant 0 : index
      %45 = vector.load %arg9[%c0_33, %c0_34] : memref<128x1xf32, #tpu.memory_space<vmem>>, vector<128x1xf32>
      tpu.vector_store %arg9[%c0_33, %c0_34], %44 {strides = array<i32>} : memref<128x1xf32, #tpu.memory_space<vmem>>, vector<128x1xf32>,
      %cst_35 = arith.constant 0.000000e+00 : f32
      %46 = vector.broadcast %cst_35 : f32 to vector<128x128xf32>
      %c0_36 = arith.constant 0 : index
      %c0_37 = arith.constant 0 : index
      %47 = vector.load %arg10[%c0_36, %c0_37] : memref<128x128xf32, #tpu.memory_space<vmem>>, vector<128x128xf32>
      tpu.vector_store %arg10[%c0_36, %c0_37], %46 {strides = array<i32>} : memref<128x128xf32, #tpu.memory_space<vmem>>, vector<128x128xf32>,
    } else {
    }
    %c0 = arith.constant 0 : index
    %c0_1 = arith.constant 0 : index
    %c0_2 = arith.constant 0 : index
    %3 = vector.load %arg3[%c0, %c0_1, %c0_2] : memref<1x128x128xbf16, #tpu.memory_space<vmem>>, vector<1x128x128xbf16>
    %4 = vector.shape_cast %3 : vector<1x128x128xbf16> to vector<128x128xbf16>
    %c0_3 = arith.constant 0 : index
    %c0_4 = arith.constant 0 : index
    %c0_5 = arith.constant 0 : index
    %5 = vector.load %arg4[%c0_3, %c0_4, %c0_5] : memref<1x256x128xbf16, #tpu.memory_space<vmem>>, vector<1x256x128xbf16>
    %6 = vector.shape_cast %5 : vector<1x256x128xbf16> to vector<256x128xbf16>
    %c0_6 = arith.constant 0 : index
    %c0_7 = arith.constant 0 : index
    %c0_8 = arith.constant 0 : index
    %7 = vector.load %arg5[%c0_6, %c0_7, %c0_8] : memref<1x256x128xbf16, #tpu.memory_space<vmem>>, vector<1x256x128xbf16>
    %8 = vector.shape_cast %7 : vector<1x256x128xbf16> to vector<256x128xbf16>
    %cst = arith.constant dense<0.000000e+00> : vector<128x256xf32>
    %9 = tpu.matmul %4, %6, %cst {dimension_numbers = #tpu.dot_dimension_numbers<[1], [1], [0], [0], [0, 0, 1, 0], [], []>} : vector<128x128xbf16>, vector<256x128xbf16>, vector<128x256xf32> -> vector<128x256xf32>
    %cst_9 = arith.constant 0.0441941731 : f32
    %10 = vector.broadcast %cst_9 : f32 to vector<128x256xf32>
    %11 = arith.mulf %9, %10 : vector<128x256xf32>
    %c0_10 = arith.constant 0 : index
    %c0_11 = arith.constant 0 : index
    %12 = vector.load %arg8[%c0_10, %c0_11] : memref<128x1xf32, #tpu.memory_space<vmem>>, vector<128x1xf32>
    %cst_12 = arith.constant dense<0xFF800000> : vector<128xf32>
    %13 = vector.multi_reduction <maximumf>, %11, %cst_12 [1] : vector<128x256xf32> to vector<128xf32>
    %14 = vector.shape_cast %13 : vector<128xf32> to vector<128x1xf32>
    %15 = arith.maximumf %12, %14 : vector<128x1xf32>
    %16 = arith.subf %12, %15 : vector<128x1xf32>
    %17 = math.exp %16 : vector<128x1xf32>
    %18 = vector.broadcast %15 : vector<128x1xf32> to vector<128x256xf32>
    %19 = arith.subf %11, %18 : vector<128x256xf32>
    %20 = math.exp %19 : vector<128x256xf32>
    %c0_13 = arith.constant 0 : index
    %c0_14 = arith.constant 0 : index
    %21 = vector.load %arg9[%c0_13, %c0_14] : memref<128x1xf32, #tpu.memory_space<vmem>>, vector<128x1xf32>
    %22 = arith.mulf %17, %21 : vector<128x1xf32>
    %cst_15 = arith.constant dense<0.000000e+00> : vector<128xf32>
    %23 = vector.multi_reduction <add>, %20, %cst_15 [1] : vector<128x256xf32> to vector<128xf32>
    %24 = vector.shape_cast %23 : vector<128xf32> to vector<128x1xf32>
    %25 = arith.addf %22, %24 : vector<128x1xf32>
    %c0_16 = arith.constant 0 : index
    %c0_17 = arith.constant 0 : index
    %26 = vector.load %arg9[%c0_16, %c0_17] : memref<128x1xf32, #tpu.memory_space<vmem>>, vector<128x1xf32>
    tpu.vector_store %arg9[%c0_16, %c0_17], %25 {strides = array<i32>} : memref<128x1xf32, #tpu.memory_space<vmem>>, vector<128x1xf32>,
    %c0_18 = arith.constant 0 : index
    %c0_19 = arith.constant 0 : index
    %c0_20 = arith.constant 0 : index
    %27 = vector.load %arg6[%c0_18, %c0_19, %c0_20] : memref<1x1x256xf32, #tpu.memory_space<vmem>>, vector<1x1x256xf32>
    %28 = vector.shape_cast %27 : vector<1x1x256xf32> to vector<1x256xf32>
    %29 = vector.broadcast %28 : vector<1x256xf32> to vector<128x256xf32>
    %30 = arith.mulf %20, %29 : vector<128x256xf32>
    %31 = arith.truncf %30 : vector<128x256xf32> to vector<128x256xbf16>
    %c0_21 = arith.constant 0 : index
    %c0_22 = arith.constant 0 : index
    %32 = vector.load %arg10[%c0_21, %c0_22] : memref<128x128xf32, #tpu.memory_space<vmem>>, vector<128x128xf32>
    %33 = vector.broadcast %17 : vector<128x1xf32> to vector<128x128xf32>
    %34 = arith.mulf %33, %32 : vector<128x128xf32>
    %cst_23 = arith.constant dense<0.000000e+00> : vector<128x128xf32>
    %35 = tpu.matmul %31, %8, %cst_23 {dimension_numbers = #tpu.dot_dimension_numbers<[1], [0], [0], [1], [0, 0, 1, 1], [], []>} : vector<128x256xbf16>, vector<256x128xbf16>, vector<128x128xf32> -> vector<128x128xf32>
    %36 = arith.addf %34, %35 : vector<128x128xf32>
    %c0_24 = arith.constant 0 : index
    %c0_25 = arith.constant 0 : index
    %37 = vector.load %arg10[%c0_24, %c0_25] : memref<128x128xf32, #tpu.memory_space<vmem>>, vector<128x128xf32>
    tpu.vector_store %arg10[%c0_24, %c0_25], %36 {strides = array<i32>} : memref<128x128xf32, #tpu.memory_space<vmem>>, vector<128x128xf32>,
    %c0_26 = arith.constant 0 : index
    %c0_27 = arith.constant 0 : index
    %38 = vector.load %arg8[%c0_26, %c0_27] : memref<128x1xf32, #tpu.memory_space<vmem>>, vector<128x1xf32>
    tpu.vector_store %arg8[%c0_26, %c0_27], %15 {strides = array<i32>} : memref<128x1xf32, #tpu.memory_space<vmem>>, vector<128x1xf32>,
    %c1_i32 = arith.constant 1 : i32
    %39 = arith.cmpi eq, %arg2, %c1_i32 : i32
    %40 = arith.extui %39 : i1 to i32
    %c0_i32_28 = arith.constant 0 : i32
    %41 = arith.cmpi ne, %40, %c0_i32_28 : i32
    scf.if %41 {
      %c0_29 = arith.constant 0 : index
      %c0_30 = arith.constant 0 : index
      %42 = vector.load %arg10[%c0_29, %c0_30] : memref<128x128xf32, #tpu.memory_space<vmem>>, vector<128x128xf32>
      %c0_31 = arith.constant 0 : index
      %c0_32 = arith.constant 0 : index
      %43 = vector.load %arg9[%c0_31, %c0_32] : memref<128x1xf32, #tpu.memory_space<vmem>>, vector<128x1xf32>
      %44 = vector.broadcast %43 : vector<128x1xf32> to vector<128x128xf32>
      %45 = arith.divf %42, %44 : vector<128x128xf32>
      %c0_33 = arith.constant 0 : index
      %c0_34 = arith.constant 0 : index
      %c0_35 = arith.constant 0 : index
      %46 = vector.load %arg7[%c0_33, %c0_34, %c0_35] : memref<1x128x128xf32, #tpu.memory_space<vmem>>, vector<1x128x128xf32>
      %47 = vector.shape_cast %46 : vector<1x128x128xf32> to vector<128x128xf32>
      %48 = vector.shape_cast %45 : vector<128x128xf32> to vector<1x128x128xf32>
      tpu.vector_store %arg7[%c0_33, %c0_34, %c0_35], %48 {strides = array<i32>} : memref<1x128x128xf32, #tpu.memory_space<vmem>>, vector<1x128x128xf32>,
    } else {
    }
    return
  }
  func.func @transform_0(%arg0: i32, %arg1: i32, %arg2: i32) -> (i32, i32, i32) {
    %c0_i32 = arith.constant 0 : i32
    %c0_i32_0 = arith.constant 0 : i32
    return %arg0, %arg1, %c0_i32 : i32, i32, i32
  }
  func.func @transform_1(%arg0: i32, %arg1: i32, %arg2: i32) -> (i32, i32, i32) {
    %c0_i32 = arith.constant 0 : i32
    %c0_i32_0 = arith.constant 0 : i32
    return %arg0, %arg2, %c0_i32 : i32, i32, i32
  }
  func.func @transform_2(%arg0: i32, %arg1: i32, %arg2: i32) -> (i32, i32, i32) {
    %c0_i32 = arith.constant 0 : i32
    %c0_i32_0 = arith.constant 0 : i32
    return %arg0, %arg2, %c0_i32 : i32, i32, i32
  }
  func.func @transform_3(%arg0: i32, %arg1: i32, %arg2: i32) -> (i32, i32, i32) {
    %c0_i32 = arith.constant 0 : i32
    %c0_i32_0 = arith.constant 0 : i32
    return %arg0, %c0_i32, %arg2 : i32, i32, i32
  }
  func.func @transform_4(%arg0: i32, %arg1: i32, %arg2: i32) -> (i32, i32, i32) {
    %c0_i32 = arith.constant 0 : i32
    %c0_i32_0 = arith.constant 0 : i32
    return %arg0, %arg1, %c0_i32 : i32, i32, i32
  }
}

</mosaic_0001>

<llo_original>
// kernel: tpu_custom_call.1
$region0: #{tpu_custom_call.1}
  #allocation0 [shape = 'u32[]', space=smem, size = 0x4, offset = 0x4, fixed_abs, tag = 'smem constant byte address 0x4 - core index']
  #allocation1 [shape = 'u32[144,128]{1,0:T(1,128)}', space=vmem, size = 0x12000, scoped, tag = 'internal scratch']
  #allocation2 [shape = 'f32[128,1]{1,0:T(8,128)}', space=vmem, size = 0x10000, scoped, tag = 'scratch operand']
  #allocation3 [shape = 'f32[128,1]{1,0:T(8,128)}', space=vmem, size = 0x10000, scoped, tag = 'scratch operand']
  #allocation4 [shape = 'f32[128,128]{1,0:T(8,128)}', space=vmem, size = 0x10000, scoped, tag = 'scratch operand']
  %s0 = inlined_call_operand.hbm [shape: bf16[4,256,128], index: 0, kind: input, shape index: {}]
  %s1 = inlined_call_operand.hbm [shape: bf16[4,512,128], index: 1, kind: input, shape index: {}]
  %s2 = inlined_call_operand.hbm [shape: bf16[4,512,128], index: 2, kind: input, shape index: {}]
  %s3 = inlined_call_operand.hbm [shape: f32[4,1,512], index: 3, kind: input, shape index: {}]
  %s4 = inlined_call_operand.hbm [shape: f32[4,256,128], index: 4, kind: output, shape index: {}]
  %s5 = sld [smem:[#allocation0]]
  $region73: #{tpu_custom_call.1} parent=0
    _
  %s7 = ssub.s32 1, %s5
  %s8 = scalar_select 0, %s7, %s5
  $region1: #{tpu_custom_call.1} parent=0
    #allocation5 [shape = 'u8[65536]{0}', space=vmem, size = 0x10000, scoped, tag = 'input window, operand 0']
    #allocation6 [shape = 's32[2]{0}', space=sflag, size = 0x8, scoped, tag = 'scoped memory for tpu_custom_call.1']
    #allocation7 [shape = 's32[2]{0}', space=sflag, size = 0x8, scoped, tag = 'scoped memory for tpu_custom_call.1']
    #allocation8 [shape = 'u8[131072]{0}', space=vmem, size = 0x20000, scoped, tag = 'input window, operand 1']
    #allocation9 [shape = 's32[2]{0}', space=sflag, size = 0x8, scoped, tag = 'scoped memory for tpu_custom_call.1']
    #allocation10 [shape = 'u8[131072]{0}', space=vmem, size = 0x20000, scoped, tag = 'input window, operand 2']
    #allocation11 [shape = 'u8[2048]{0}', space=vmem, size = 0x800, scoped, tag = 'input window, operand 3']
    #allocation12 [shape = 's32[2]{0}', space=sflag, size = 0x8, scoped, tag = 'scoped memory for tpu_custom_call.1']
    #allocation13 [shape = 'u8[131072]{0}', space=vmem, size = 0x20000, scoped, tag = 'output window, operand 0']
    %9 = vsyncpa [#allocation6], 0
    %s10 = scalar_lea.sflag [#allocation6], 1
    %11 = vsyncpa %s10, 0
    %12 = vsyncpa [#allocation9], 0
    %s13 = scalar_lea.sflag [#allocation9], 1
    %14 = vsyncpa %s13, 0
    %15 = vsyncpa [#allocation12], 0
    %s16 = scalar_lea.sflag [#allocation12], 1
    %17 = vsyncpa %s16, 0
    %18 = vsyncpa [#allocation7], 0
    %s19 = scalar_lea.sflag [#allocation7], 1
    %20 = vsyncpa %s19, 0
    loop: start=0, step=1, limit=18
    $region2: #{tpu_custom_call.1} parent=1 // loop_pre_header
      _
    $region3: #{tpu_custom_call.1} parent=1 // loop_header
      %s22 = sphi 0, %s26
      %p23 = scmp.ge.s32.totalorder %s22, 18
      %s29 = sphi 0, %s48
      %s30 = sphi 0, %s44
      %s31 = sphi 0, %s40
      %s32 = sphi 0, %s29
      %s33 = sphi 0, %s30
      %s34 = sphi 0, %s31
      %s35 = sphi 0, %s32
      %s36 = sphi 0, %s33
      %s37 = sphi 0, %s34
      %s53 = sphi 0, %s55
      %s56 = sphi 0, %s53
      %s57 = sphi 0, %s56
      %s73 = sphi 0, %s57
      %s81 = sphi 0, %s83
      %s84 = sphi 0, %s81
      %s85 = sphi 0, %s84
      %s101 = sphi 0, %s85
      %s109 = sphi 0, %s111
      %s112 = sphi 0, %s109
      %s113 = sphi 0, %s112
      %s129 = sphi 0, %s113
      %s137 = sphi 0, %s139
      %s140 = sphi 0, %s137
      %s141 = sphi 0, %s140
      %s157 = sphi 0, %s141
      %s165 = sphi 0, %s167
      %s168 = sphi 0, %s165
      %s169 = sphi 0, %s168
      %s185 = sphi 0, %s169
    $region4: #{tpu_custom_call.1} parent=1 // loop_header_branch
      %25 = sbr.rel (%p23) target = $region8
    $region5: #{tpu_custom_call.1} parent=1 // loop_body
      %s27 = ssub.s32 %s22, 1
      %s28 = ssub.s32 %s22, 2
      %s38 = sadd.s32 1, %s31
      %p39 = scmp.ge.s32.totalorder %s38, 2
      %s40 = scalar_select %p39, 0, %s38
      %s41 = sadd.s32 1, %s30
      %s42 = scalar_select %p39, %s41, %s30
      %p43 = scmp.ge.s32.totalorder %s42, 2
      %s44 = scalar_select %p43, 0, %s42
      %s45 = sadd.s32 1, %s29
      %s46 = scalar_select %p43, %s45, %s29
      %p47 = scmp.ge.s32.totalorder %s46, 4
      %s48 = scalar_select %p47, 0, %s46
      %s49 = ssub.s32 %s29, %s48
      %s50 = ssub.s32 %s30, %s44
      %s51 = sor.u32 %s49, %s50
      %p52 = scmp.eq.s32.totalorder %s51, 0
      %s54 = sadd.s32 %s53, 1
      %s55 = scalar_select %p52, %s53, %s54
      %p58 = pneg %p52
      %p59 = scmp.eq.s32.totalorder %s22, 15
      %p60 = por %p58, %p59
      %p61 = scmp.ne.s32.totalorder %s53, %s56
      %p62 = scmp.eq.s32.totalorder %s22, 0
      %p63 = por %p61, %p62
      %p64 = scmp.ne.s32.totalorder %s53, %s56
      %p65 = scmp.eq.s32.totalorder %s27, 15
      %p66 = por %p64, %p65
      %p67 = scmp.ne.s32.totalorder %s56, %s57
      %p68 = scmp.eq.s32.totalorder %s27, 0
      %p69 = por %p67, %p68
      %p70 = scmp.ne.s32.totalorder %s56, %s57
      %p71 = scmp.eq.s32.totalorder %s28, 15
      %p72 = por %p70, %p71
      %p74 = scmp.ne.s32.totalorder %s57, %s73
      %p75 = scmp.eq.s32.totalorder %s28, 0
      %p76 = por %p74, %p75
      %s77 = ssub.s32 %s29, %s48
      %s78 = ssub.s32 %s31, %s40
      %s79 = sor.u32 %s77, %s78
      %p80 = scmp.eq.s32.totalorder %s79, 0
      %s82 = sadd.s32 %s81, 1
      %s83 = scalar_select %p80, %s81, %s82
      %p86 = pneg %p80
      %p87 = scmp.eq.s32.totalorder %s22, 15
      %p88 = por %p86, %p87
      %p89 = scmp.ne.s32.totalorder %s81, %s84
      %p90 = scmp.eq.s32.totalorder %s22, 0
      %p91 = por %p89, %p90
      %p92 = scmp.ne.s32.totalorder %s81, %s84
      %p93 = scmp.eq.s32.totalorder %s27, 15
      %p94 = por %p92, %p93
      %p95 = scmp.ne.s32.totalorder %s84, %s85
      %p96 = scmp.eq.s32.totalorder %s27, 0
      %p97 = por %p95, %p96
      %p98 = scmp.ne.s32.totalorder %s84, %s85
      %p99 = scmp.eq.s32.totalorder %s28, 15
      %p100 = por %p98, %p99
      %p102 = scmp.ne.s32.totalorder %s85, %s101
      %p103 = scmp.eq.s32.totalorder %s28, 0
      %p104 = por %p102, %p103
      %s105 = ssub.s32 %s29, %s48
      %s106 = ssub.s32 %s31, %s40
      %s107 = sor.u32 %s105, %s106
      %p108 = scmp.eq.s32.totalorder %s107, 0
      %s110 = sadd.s32 %s109, 1
      %s111 = scalar_select %p108, %s109, %s110
      %p114 = pneg %p108
      %p115 = scmp.eq.s32.totalorder %s22, 15
      %p116 = por %p114, %p115
      %p117 = scmp.ne.s32.totalorder %s109, %s112
      %p118 = scmp.eq.s32.totalorder %s22, 0
      %p119 = por %p117, %p118
      %p120 = scmp.ne.s32.totalorder %s109, %s112
      %p121 = scmp.eq.s32.totalorder %s27, 15
      %p122 = por %p120, %p121
      %p123 = scmp.ne.s32.totalorder %s112, %s113
      %p124 = scmp.eq.s32.totalorder %s27, 0
      %p125 = por %p123, %p124
      %p126 = scmp.ne.s32.totalorder %s112, %s113
      %p127 = scmp.eq.s32.totalorder %s28, 15
      %p128 = por %p126, %p127
      %p130 = scmp.ne.s32.totalorder %s113, %s129
      %p131 = scmp.eq.s32.totalorder %s28, 0
      %p132 = por %p130, %p131
      %s133 = ssub.s32 %s29, %s48
      %s134 = ssub.s32 %s31, %s40
      %s135 = sor.u32 %s133, %s134
      %p136 = scmp.eq.s32.totalorder %s135, 0
      %s138 = sadd.s32 %s137, 1
      %s139 = scalar_select %p136, %s137, %s138
      %p142 = pneg %p136
      %p143 = scmp.eq.s32.totalorder %s22, 15
      %p144 = por %p142, %p143
      %p145 = scmp.ne.s32.totalorder %s137, %s140
      %p146 = scmp.eq.s32.totalorder %s22, 0
      %p147 = por %p145, %p146
      %p148 = scmp.ne.s32.totalorder %s137, %s140
      %p149 = scmp.eq.s32.totalorder %s27, 15
      %p150 = por %p148, %p149
      %p151 = scmp.ne.s32.totalorder %s140, %s141
      %p152 = scmp.eq.s32.totalorder %s27, 0
      %p153 = por %p151, %p152
      %p154 = scmp.ne.s32.totalorder %s140, %s141
      %p155 = scmp.eq.s32.totalorder %s28, 15
      %p156 = por %p154, %p155
      %p158 = scmp.ne.s32.totalorder %s141, %s157
      %p159 = scmp.eq.s32.totalorder %s28, 0
      %p160 = por %p158, %p159
      %s161 = ssub.s32 %s29, %s48
      %s162 = ssub.s32 %s30, %s44
      %s163 = sor.u32 %s161, %s162
      %p164 = scmp.eq.s32.totalorder %s163, 0
      %s166 = sadd.s32 %s165, 1
      %s167 = scalar_select %p164, %s165, %s166
      %p170 = pneg %p164
      %p171 = scmp.eq.s32.totalorder %s22, 15
      %p172 = por %p170, %p171
      %p173 = scmp.ne.s32.totalorder %s165, %s168
      %p174 = scmp.eq.s32.totalorder %s22, 0
      %p175 = por %p173, %p174
      %p176 = scmp.ne.s32.totalorder %s165, %s168
      %p177 = scmp.eq.s32.totalorder %s27, 15
      %p178 = por %p176, %p177
      %p179 = scmp.ne.s32.totalorder %s168, %s169
      %p180 = scmp.eq.s32.totalorder %s27, 0
      %p181 = por %p179, %p180
      %p182 = scmp.ne.s32.totalorder %s168, %s169
      %p183 = scmp.eq.s32.totalorder %s28, 15
      %p184 = por %p182, %p183
      %p186 = scmp.ne.s32.totalorder %s169, %s185
      %p187 = scmp.eq.s32.totalorder %s28, 0
      %p188 = por %p186, %p187
      %p189 = scmp.le.s32.totalorder 1, %s22
      %p190 = scmp.lt.s32.totalorder %s22, 17
      %p191 = pnand %p189, %p190
      %p192 = pneg %p191
      // Predicated region
      $region9: #{tpu_custom_call.1} parent=5 // pred_check
        _
      $region10: #{tpu_custom_call.1} parent=5 // pred_check_branch
        %194 = sbr.rel (%p191) target = $region12
      $region11: #{tpu_custom_call.1} parent=5 // pred_region
        %s195 = ssub.s32 %s22, 1
      $region12: #{tpu_custom_call.1} parent=5 // pred_fallthru
        _
      %p196 = scmp.lt.s32.totalorder %s22, 16
      // Predicated region
      $region13: #{tpu_custom_call.1} parent=5 // pred_check
        %p197 = pneg %p196
      $region14: #{tpu_custom_call.1} parent=5 // pred_check_branch
        %199 = sbr.rel (%p197) target = $region16
      $region15: #{tpu_custom_call.1} parent=5 // pred_region
        // Predicated region
        $region17: #{tpu_custom_call.1} parent=15 // pred_check
          %p200 = pneg %p63
        $region18: #{tpu_custom_call.1} parent=15 // pred_check_branch
          %202 = sbr.rel (%p200) target = $region20
        $region19: #{tpu_custom_call.1} parent=15 // pred_region
          %s203 = sand.u32 %s53, 1
          %s204 = scalar_lea.sflag [#allocation6], %s203
          %s205 = sand.u32 %s53, 1
          %s206 = smul.addr %s205, 64
          %s207 = scalar_lea.vmem [#allocation5], %s206
          %s208 = smul.u32 16, %s30
          %s210 = ssub.s32 1024, 1024
          %211 = vsyncadd %s204, %s210
          %s212 = smul.addr %s29, 32
          %s213 = sadd.s32 %s208, %s212
          %s214 = smul.addr %s213, 64
          %s215 = scalar_lea.hbm %s0, %s214
          %s216 = sshll.u32 %s207, 4
          %s217 = int_to_ptr.vmem [resolvable:$true] %s216
          %222 = dma.hbm_to_vmem [thread:$0]  %s215, 1024, %s217, %s204, 64, 64, 4
        $region20: #{tpu_custom_call.1} parent=15 // pred_fallthru
          _
        // Predicated region
        $region21: #{tpu_custom_call.1} parent=15 // pred_check
          %p223 = pneg %p91
        $region22: #{tpu_custom_call.1} parent=15 // pred_check_branch
          %225 = sbr.rel (%p223) target = $region24
        $region23: #{tpu_custom_call.1} parent=15 // pred_region
          %s226 = sand.u32 %s22, 1
          %s227 = scalar_lea.sflag [#allocation9], %s226
          %s228 = sand.u32 %s81, 1
          %s229 = smul.addr %s228, 128
          %s230 = scalar_lea.vmem [#allocation8], %s229
          %s231 = smul.u32 32, %s31
          %s233 = ssub.s32 2048, 2048
          %234 = vsyncadd %s227, %s233
          %s235 = smul.addr %s29, 64
          %s236 = sadd.s32 %s231, %s235
          %s237 = smul.addr %s236, 64
          %s238 = scalar_lea.hbm %s1, %s237
          %s239 = sshll.u32 %s230, 4
          %s240 = int_to_ptr.vmem [resolvable:$true] %s239
          %245 = dma.hbm_to_vmem [thread:$0]  %s238, 2048, %s240, %s227, 64, 64, 4
        $region24: #{tpu_custom_call.1} parent=15 // pred_fallthru
          _
        // Predicated region
        $region25: #{tpu_custom_call.1} parent=15 // pred_check
          %p246 = pneg %p119
        $region26: #{tpu_custom_call.1} parent=15 // pred_check_branch
          %248 = sbr.rel (%p246) target = $region28
        $region27: #{tpu_custom_call.1} parent=15 // pred_region
          %s249 = sand.u32 %s22, 1
          %s250 = scalar_lea.sflag [#allocation9], %s249
          %s251 = sand.u32 %s109, 1
          %s252 = smul.addr %s251, 128
          %s253 = scalar_lea.vmem [#allocation10], %s252
          %s254 = smul.u32 32, %s31
          %s256 = ssub.s32 2048, 2048
          %257 = vsyncadd %s250, %s256
          %s258 = smul.addr %s29, 64
          %s259 = sadd.s32 %s254, %s258
          %s260 = smul.addr %s259, 64
          %s261 = scalar_lea.hbm %s2, %s260
          %s262 = sshll.u32 %s253, 4
          %s263 = int_to_ptr.vmem [resolvable:$true] %s262
          %268 = dma.hbm_to_vmem [thread:$0]  %s261, 2048, %s263, %s250, 64, 64, 4
        $region28: #{tpu_custom_call.1} parent=15 // pred_fallthru
          _
        // Predicated region
        $region29: #{tpu_custom_call.1} parent=15 // pred_check
          %p269 = pneg %p147
        $region30: #{tpu_custom_call.1} parent=15 // pred_check_branch
          %271 = sbr.rel (%p269) target = $region32
        $region31: #{tpu_custom_call.1} parent=15 // pred_region
          %s272 = sand.u32 %s137, 1
          %s273 = scalar_lea.sflag [#allocation12], %s272
          %s274 = sand.u32 %s137, 1
          %s275 = smul.addr %s274, 2
          %s276 = scalar_lea.vmem [#allocation11], %s275
          %s277 = smul.u32 2, %s31
          %s279 = ssub.s32 32, 32
          %280 = vsyncadd %s273, %s279
          %s281 = smul.addr %s29, 4
          %s282 = sadd.s32 %s277, %s281
          %s283 = smul.addr %s282, 16
          %s284 = scalar_lea.hbm %s3, %s283
          %s286 = sshll.u32 %s276, 4
          %s287 = int_to_ptr.vmem [resolvable:$true] %s286
          %289 = dma.hbm_to_vmem [thread:$0]  %s284, 32, %s287, %s273
        $region32: #{tpu_custom_call.1} parent=15 // pred_fallthru
          _
      $region16: #{tpu_custom_call.1} parent=5 // pred_fallthru
        _
      %p290 = scmp.le.s32.totalorder 1, %s22
      %p291 = scmp.lt.s32.totalorder %s22, 17
      %p292 = pnand %p290, %p291
      %p293 = pneg %p292
      // Predicated region
      $region33: #{tpu_custom_call.1} parent=5 // pred_check
        _
      $region34: #{tpu_custom_call.1} parent=5 // pred_check_branch
        %295 = sbr.rel (%p292) target = $region36
      $region35: #{tpu_custom_call.1} parent=5 // pred_region
        %s296 = ssub.s32 %s22, 1
        %s297 = sand.u32 %s56, 1
        %s298 = scalar_lea.sflag [#allocation6], %s297
        %s299 = sand.u32 %s56, 1
        %s300 = smul.addr %s299, 64
        %s301 = scalar_lea.vmem [#allocation5], %s300
        // Predicated region
        $region37: #{tpu_custom_call.1} parent=35 // pred_check
          %p302 = pneg %p69
        $region38: #{tpu_custom_call.1} parent=35 // pred_check_branch
          %304 = sbr.rel (%p302) target = $region40
        $region39: #{tpu_custom_call.1} parent=35 // pred_region
          %305 = dma.done %s298, 1024
        $region40: #{tpu_custom_call.1} parent=35 // pred_fallthru
          _
        %s306 = sand.u32 %s27, 1
        %s307 = scalar_lea.sflag [#allocation9], %s306
        %s308 = sand.u32 %s84, 1
        %s309 = smul.addr %s308, 128
        %s310 = scalar_lea.vmem [#allocation8], %s309
        // Predicated region
        $region41: #{tpu_custom_call.1} parent=35 // pred_check
          %p311 = pneg %p97
        $region42: #{tpu_custom_call.1} parent=35 // pred_check_branch
          %313 = sbr.rel (%p311) target = $region44
        $region43: #{tpu_custom_call.1} parent=35 // pred_region
          %314 = dma.done %s307, 2048
        $region44: #{tpu_custom_call.1} parent=35 // pred_fallthru
          _
        %s315 = sand.u32 %s27, 1
        %s316 = scalar_lea.sflag [#allocation9], %s315
        %s317 = sand.u32 %s112, 1
        %s318 = smul.addr %s317, 128
        %s319 = scalar_lea.vmem [#allocation10], %s318
        // Predicated region
        $region45: #{tpu_custom_call.1} parent=35 // pred_check
          %p320 = pneg %p125
        $region46: #{tpu_custom_call.1} parent=35 // pred_check_branch
          %322 = sbr.rel (%p320) target = $region48
        $region47: #{tpu_custom_call.1} parent=35 // pred_region
          %323 = dma.done %s316, 2048
        $region48: #{tpu_custom_call.1} parent=35 // pred_fallthru
          _
        %s324 = sand.u32 %s140, 1
        %s325 = scalar_lea.sflag [#allocation12], %s324
        %s326 = sand.u32 %s140, 1
        %s327 = smul.addr %s326, 2
        %s328 = scalar_lea.vmem [#allocation11], %s327
        // Predicated region
        $region49: #{tpu_custom_call.1} parent=35 // pred_check
          %p329 = pneg %p153
        $region50: #{tpu_custom_call.1} parent=35 // pred_check_branch
          %331 = sbr.rel (%p329) target = $region52
        $region51: #{tpu_custom_call.1} parent=35 // pred_region
          %332 = dma.done %s325, 32
        $region52: #{tpu_custom_call.1} parent=35 // pred_fallthru
          _
        %s333 = sand.u32 %s56, 1
        %s334 = scalar_lea.sflag [#allocation6], %s333
        %s335 = sand.u32 %s56, 1
        %s336 = smul.addr %s335, 64
        %s337 = scalar_lea.vmem [#allocation5], %s336
        %p338 = pneg %p69
        %p339 = pneg %p66
        %s340 = sand.u32 %s27, 1
        %s341 = scalar_lea.sflag [#allocation9], %s340
        %s342 = sand.u32 %s84, 1
        %s343 = smul.addr %s342, 128
        %s344 = scalar_lea.vmem [#allocation8], %s343
        %p345 = pneg %p97
        %p346 = pneg %p94
        %s347 = sand.u32 %s27, 1
        %s348 = scalar_lea.sflag [#allocation9], %s347
        %s349 = sand.u32 %s112, 1
        %s350 = smul.addr %s349, 128
        %s351 = scalar_lea.vmem [#allocation10], %s350
        %p352 = pneg %p125
        %p353 = pneg %p122
        %s354 = sand.u32 %s140, 1
        %s355 = scalar_lea.sflag [#allocation12], %s354
        %s356 = sand.u32 %s140, 1
        %s357 = smul.addr %s356, 2
        %s358 = scalar_lea.vmem [#allocation11], %s357
        %p359 = pneg %p153
        %p360 = pneg %p150
        %p361 = pneg %p181
        %p362 = pneg %p178
        %s363 = sand.u32 %s168, 1
        %s364 = scalar_lea.sflag [#allocation7], %s363
        %s365 = sand.u32 %s168, 1
        %s366 = smul.addr %s365, 128
        %s367 = scalar_lea.vmem [#allocation13], %s366
        %s368 = smul.u32 16, %s33
        %s369 = smul.u32 32, %s34
        %s370 = smul.u32 32, %s34
        %s371 = smul.u32 2, %s34
        %s372 = smul.u32 16, %s33
        %p374 = scmp.eq.s32.totalorder %s34, 0
        // Predicated region
        $region53: #{tpu_custom_call.1} parent=35 // pred_check
          %p375 = pneg %p374
        $region54: #{tpu_custom_call.1} parent=35 // pred_check_branch
          %377 = sbr.rel (%p375) target = $region56
        $region55: #{tpu_custom_call.1} parent=35 // pred_region
          %vm378 = vcmask 7168
          %379 = vst.msk [vmem:[#allocation2] sm:$0xff] %vm378, -inf
          %380 = vst.msk [vmem:[#allocation2 + $0x8] sm:$0xff] %vm378, -inf
          %381 = vst.msk [vmem:[#allocation2 + $0x10] sm:$0xff] %vm378, -inf
          %382 = vst.msk [vmem:[#allocation2 + $0x18] sm:$0xff] %vm378, -inf
          %383 = vst.msk [vmem:[#allocation2 + $0x20] sm:$0xff] %vm378, -inf
          %384 = vst.msk [vmem:[#allocation2 + $0x28] sm:$0xff] %vm378, -inf
          %385 = vst.msk [vmem:[#allocation2 + $0x30] sm:$0xff] %vm378, -inf
          %386 = vst.msk [vmem:[#allocation2 + $0x38] sm:$0xff] %vm378, -inf
          %387 = vst.msk [vmem:[#allocation2 + $0x40] sm:$0xff] %vm378, -inf
          %388 = vst.msk [vmem:[#allocation2 + $0x48] sm:$0xff] %vm378, -inf
          %389 = vst.msk [vmem:[#allocation2 + $0x50] sm:$0xff] %vm378, -inf
          %390 = vst.msk [vmem:[#allocation2 + $0x58] sm:$0xff] %vm378, -inf
          %391 = vst.msk [vmem:[#allocation2 + $0x60] sm:$0xff] %vm378, -inf
          %392 = vst.msk [vmem:[#allocation2 + $0x68] sm:$0xff] %vm378, -inf
          %393 = vst.msk [vmem:[#allocation2 + $0x70] sm:$0xff] %vm378, -inf
          %394 = vst.msk [vmem:[#allocation2 + $0x78] sm:$0xff] %vm378, -inf
          %395 = vst.msk [vmem:[#allocation3] sm:$0xff] %vm378, 0.0
          %396 = vst.msk [vmem:[#allocation3 + $0x8] sm:$0xff] %vm378, 0.0
          %397 = vst.msk [vmem:[#allocation3 + $0x10] sm:$0xff] %vm378, 0.0
          %398 = vst.msk [vmem:[#allocation3 + $0x18] sm:$0xff] %vm378, 0.0
          %399 = vst.msk [vmem:[#allocation3 + $0x20] sm:$0xff] %vm378, 0.0
          %400 = vst.msk [vmem:[#allocation3 + $0x28] sm:$0xff] %vm378, 0.0
          %401 = vst.msk [vmem:[#allocation3 + $0x30] sm:$0xff] %vm378, 0.0
          %402 = vst.msk [vmem:[#allocation3 + $0x38] sm:$0xff] %vm378, 0.0
          %403 = vst.msk [vmem:[#allocation3 + $0x40] sm:$0xff] %vm378, 0.0
          %404 = vst.msk [vmem:[#allocation3 + $0x48] sm:$0xff] %vm378, 0.0
          %405 = vst.msk [vmem:[#allocation3 + $0x50] sm:$0xff] %vm378, 0.0
          %406 = vst.msk [vmem:[#allocation3 + $0x58] sm:$0xff] %vm378, 0.0
          %407 = vst.msk [vmem:[#allocation3 + $0x60] sm:$0xff] %vm378, 0.0
          %408 = vst.msk [vmem:[#allocation3 + $0x68] sm:$0xff] %vm378, 0.0
          %409 = vst.msk [vmem:[#allocation3 + $0x70] sm:$0xff] %vm378, 0.0
          %410 = vst.msk [vmem:[#allocation3 + $0x78] sm:$0xff] %vm378, 0.0
          %411 = vst [vmem:[#allocation4] sm:$0xff] 0.0
          %412 = vst [vmem:[#allocation4 + $0x8] sm:$0xff] 0.0
          %413 = vst [vmem:[#allocation4 + $0x10] sm:$0xff] 0.0
          %414 = vst [vmem:[#allocation4 + $0x18] sm:$0xff] 0.0
          %415 = vst [vmem:[#allocation4 + $0x20] sm:$0xff] 0.0
          %416 = vst [vmem:[#allocation4 + $0x28] sm:$0xff] 0.0
          %417 = vst [vmem:[#allocation4 + $0x30] sm:$0xff] 0.0
          %418 = vst [vmem:[#allocation4 + $0x38] sm:$0xff] 0.0
          %419 = vst [vmem:[#allocation4 + $0x40] sm:$0xff] 0.0
          %420 = vst [vmem:[#allocation4 + $0x48] sm:$0xff] 0.0
          %421 = vst [vmem:[#allocation4 + $0x50] sm:$0xff] 0.0
          %422 = vst [vmem:[#allocation4 + $0x58] sm:$0xff] 0.0
          %423 = vst [vmem:[#allocation4 + $0x60] sm:$0xff] 0.0
          %424 = vst [vmem:[#allocation4 + $0x68] sm:$0xff] 0.0
          %425 = vst [vmem:[#allocation4 + $0x70] sm:$0xff] 0.0
          %426 = vst [vmem:[#allocation4 + $0x78] sm:$0xff] 0.0
        $region56: #{tpu_custom_call.1} parent=35 // pred_fallthru
          _
        %v427 = vld [vmem:[%s301] sm:$0xf]
        %v428 = vld [vmem:[%s301 + $0x4] sm:$0xf]
        %v429 = vld [vmem:[%s301 + $0x8] sm:$0xf]
        %v430 = vld [vmem:[%s301 + $0xc] sm:$0xf]
        %v431 = vld [vmem:[%s301 + $0x10] sm:$0xf]
        %v432 = vld [vmem:[%s301 + $0x14] sm:$0xf]
        %v433 = vld [vmem:[%s301 + $0x18] sm:$0xf]
        %v434 = vld [vmem:[%s301 + $0x1c] sm:$0xf]
        %v435 = vld [vmem:[%s301 + $0x20] sm:$0xf]
        %v436 = vld [vmem:[%s301 + $0x24] sm:$0xf]
        %v437 = vld [vmem:[%s301 + $0x28] sm:$0xf]
        %v438 = vld [vmem:[%s301 + $0x2c] sm:$0xf]
        %v439 = vld [vmem:[%s301 + $0x30] sm:$0xf]
        %v440 = vld [vmem:[%s301 + $0x34] sm:$0xf]
        %v441 = vld [vmem:[%s301 + $0x38] sm:$0xf]
        %v442 = vld [vmem:[%s301 + $0x3c] sm:$0xf]
        %v443 = vld [vmem:[%s310] sm:$0xf]
        %v444 = vld [vmem:[%s310 + $0x4] sm:$0xf]
        %v445 = vld [vmem:[%s310 + $0x8] sm:$0xf]
        %v446 = vld [vmem:[%s310 + $0xc] sm:$0xf]
        %v447 = vld [vmem:[%s310 + $0x10] sm:$0xf]
        %v448 = vld [vmem:[%s310 + $0x14] sm:$0xf]
        %v449 = vld [vmem:[%s310 + $0x18] sm:$0xf]
        %v450 = vld [vmem:[%s310 + $0x1c] sm:$0xf]
        %v451 = vld [vmem:[%s310 + $0x20] sm:$0xf]
        %v452 = vld [vmem:[%s310 + $0x24] sm:$0xf]
        %v453 = vld [vmem:[%s310 + $0x28] sm:$0xf]
        %v454 = vld [vmem:[%s310 + $0x2c] sm:$0xf]
        %v455 = vld [vmem:[%s310 + $0x30] sm:$0xf]
        %v456 = vld [vmem:[%s310 + $0x34] sm:$0xf]
        %v457 = vld [vmem:[%s310 + $0x38] sm:$0xf]
        %v458 = vld [vmem:[%s310 + $0x3c] sm:$0xf]
        %v459 = vld [vmem:[%s310 + $0x40] sm:$0xf]
        %v460 = vld [vmem:[%s310 + $0x44] sm:$0xf]
        %v461 = vld [vmem:[%s310 + $0x48] sm:$0xf]
        %v462 = vld [vmem:[%s310 + $0x4c] sm:$0xf]
        %v463 = vld [vmem:[%s310 + $0x50] sm:$0xf]
        %v464 = vld [vmem:[%s310 + $0x54] sm:$0xf]
        %v465 = vld [vmem:[%s310 + $0x58] sm:$0xf]
        %v466 = vld [vmem:[%s310 + $0x5c] sm:$0xf]
        %v467 = vld [vmem:[%s310 + $0x60] sm:$0xf]
        %v468 = vld [vmem:[%s310 + $0x64] sm:$0xf]
        %v469 = vld [vmem:[%s310 + $0x68] sm:$0xf]
        %v470 = vld [vmem:[%s310 + $0x6c] sm:$0xf]
        %v471 = vld [vmem:[%s310 + $0x70] sm:$0xf]
        %v472 = vld [vmem:[%s310 + $0x74] sm:$0xf]
        %v473 = vld [vmem:[%s310 + $0x78] sm:$0xf]
        %v474 = vld [vmem:[%s310 + $0x7c] sm:$0xf]
        %v475 = vld [vmem:[%s319] sm:$0xf]
        %v476 = vld [vmem:[%s319 + $0x4] sm:$0xf]
        %v477 = vld [vmem:[%s319 + $0x8] sm:$0xf]
        %v478 = vld [vmem:[%s319 + $0xc] sm:$0xf]
        %v479 = vld [vmem:[%s319 + $0x10] sm:$0xf]
        %v480 = vld [vmem:[%s319 + $0x14] sm:$0xf]
        %v481 = vld [vmem:[%s319 + $0x18] sm:$0xf]
        %v482 = vld [vmem:[%s319 + $0x1c] sm:$0xf]
        %v483 = vld [vmem:[%s319 + $0x20] sm:$0xf]
        %v484 = vld [vmem:[%s319 + $0x24] sm:$0xf]
        %v485 = vld [vmem:[%s319 + $0x28] sm:$0xf]
        %v486 = vld [vmem:[%s319 + $0x2c] sm:$0xf]
        %v487 = vld [vmem:[%s319 + $0x30] sm:$0xf]
        %v488 = vld [vmem:[%s319 + $0x34] sm:$0xf]
        %v489 = vld [vmem:[%s319 + $0x38] sm:$0xf]
        %v490 = vld [vmem:[%s319 + $0x3c] sm:$0xf]
        %v491 = vld [vmem:[%s319 + $0x40] sm:$0xf]
        %v492 = vld [vmem:[%s319 + $0x44] sm:$0xf]
        %v493 = vld [vmem:[%s319 + $0x48] sm:$0xf]
        %v494 = vld [vmem:[%s319 + $0x4c] sm:$0xf]
        %v495 = vld [vmem:[%s319 + $0x50] sm:$0xf]
        %v496 = vld [vmem:[%s319 + $0x54] sm:$0xf]
        %v497 = vld [vmem:[%s319 + $0x58] sm:$0xf]
        %v498 = vld [vmem:[%s319 + $0x5c] sm:$0xf]
        %v499 = vld [vmem:[%s319 + $0x60] sm:$0xf]
        %v500 = vld [vmem:[%s319 + $0x64] sm:$0xf]
        %v501 = vld [vmem:[%s319 + $0x68] sm:$0xf]
        %v502 = vld [vmem:[%s319 + $0x6c] sm:$0xf]
        %v503 = vld [vmem:[%s319 + $0x70] sm:$0xf]
        %v504 = vld [vmem:[%s319 + $0x74] sm:$0xf]
        %v505 = vld [vmem:[%s319 + $0x78] sm:$0xf]
        %v506 = vld [vmem:[%s319 + $0x7c] sm:$0xf]
        %v523 = vunpack.c.l.b16 %v427
        %v524 = vunpack.c.l.b16 %v428
        %v525 = vunpack.c.l.b16 %v429
        %v526 = vunpack.c.l.b16 %v430
        %v527 = vunpack.c.l.b16 %v431
        %v528 = vunpack.c.l.b16 %v432
        %v529 = vunpack.c.l.b16 %v433
        %v530 = vunpack.c.l.b16 %v434
        %v531 = vunpack.c.l.b16 %v435
        %v532 = vunpack.c.l.b16 %v436
        %v533 = vunpack.c.l.b16 %v437
        %v534 = vunpack.c.l.b16 %v438
        %v535 = vunpack.c.l.b16 %v439
        %v536 = vunpack.c.l.b16 %v440
        %v537 = vunpack.c.l.b16 %v441
        %v538 = vunpack.c.l.b16 %v442
        %v539 = vpack.c.b16 %v524, %v523
        %v540 = vpack.c.b16 %v526, %v525
        %v541 = vpack.c.b16 %v528, %v527
        %v542 = vpack.c.b16 %v530, %v529
        %v543 = vpack.c.b16 %v532, %v531
        %v544 = vpack.c.b16 %v534, %v533
        %v545 = vpack.c.b16 %v536, %v535
        %v546 = vpack.c.b16 %v538, %v537
        %v587 = vunpack.c.l.b16 %v443
        %v588 = vunpack.c.l.b16 %v444
        %v589 = vunpack.c.l.b16 %v445
        %v590 = vunpack.c.l.b16 %v446
        %v591 = vunpack.c.l.b16 %v447
        %v592 = vunpack.c.l.b16 %v448
        %v593 = vunpack.c.l.b16 %v449
        %v594 = vunpack.c.l.b16 %v450
        %v595 = vunpack.c.l.b16 %v451
        %v596 = vunpack.c.l.b16 %v452
        %v597 = vunpack.c.l.b16 %v453
        %v598 = vunpack.c.l.b16 %v454
        %v599 = vunpack.c.l.b16 %v455
        %v600 = vunpack.c.l.b16 %v456
        %v601 = vunpack.c.l.b16 %v457
        %v602 = vunpack.c.l.b16 %v458
        %v603 = vunpack.c.l.b16 %v459
        %v604 = vunpack.c.l.b16 %v460
        %v605 = vunpack.c.l.b16 %v461
        %v606 = vunpack.c.l.b16 %v462
        %v607 = vunpack.c.l.b16 %v463
        %v608 = vunpack.c.l.b16 %v464
        %v609 = vunpack.c.l.b16 %v465
        %v610 = vunpack.c.l.b16 %v466
        %v611 = vunpack.c.l.b16 %v467
        %v612 = vunpack.c.l.b16 %v468
        %v613 = vunpack.c.l.b16 %v469
        %v614 = vunpack.c.l.b16 %v470
        %v615 = vunpack.c.l.b16 %v471
        %v616 = vunpack.c.l.b16 %v472
        %v617 = vunpack.c.l.b16 %v473
        %v618 = vunpack.c.l.b16 %v474
        %v619 = vpack.c.b16 %v588, %v587
        %v620 = vpack.c.b16 %v590, %v589
        %v621 = vpack.c.b16 %v592, %v591
        %v622 = vpack.c.b16 %v594, %v593
        %v623 = vpack.c.b16 %v596, %v595
        %v624 = vpack.c.b16 %v598, %v597
        %v625 = vpack.c.b16 %v600, %v599
        %v626 = vpack.c.b16 %v602, %v601
        %v627 = vpack.c.b16 %v604, %v603
        %v628 = vpack.c.b16 %v606, %v605
        %v629 = vpack.c.b16 %v608, %v607
        %v630 = vpack.c.b16 %v610, %v609
        %v631 = vpack.c.b16 %v612, %v611
        %v632 = vpack.c.b16 %v614, %v613
        %v633 = vpack.c.b16 %v616, %v615
        %v634 = vpack.c.b16 %v618, %v617
        %651 = vmatprep.subr.bf16.mxu0 0
        %652 = vmatpush1.bf16.xpose.msra.mxu0 %v619
        %653 = vmatprep.subr.bf16.mxu0 0
        %654 = vmatpush1.bf16.xpose.msra.mxu0 %v620
        %655 = vmatprep.subr.bf16.mxu0 0
        %656 = vmatpush1.bf16.xpose.msra.mxu0 %v621
        %657 = vmatprep.subr.bf16.mxu0 0
        %658 = vmatpush1.bf16.xpose.msra.mxu0 %v622
        %659 = vmatprep.subr.bf16.mxu0 0
        %660 = vmatpush1.bf16.xpose.msra.mxu0 %v623
        %661 = vmatprep.subr.bf16.mxu0 0
        %662 = vmatpush1.bf16.xpose.msra.mxu0 %v624
        %663 = vmatprep.subr.bf16.mxu0 0
        %664 = vmatpush1.bf16.xpose.msra.mxu0 %v625
        %665 = vmatprep.subr.bf16.mxu0 0
        %666 = vmatpush1.bf16.xpose.msra.mxu0 %v626
        %667 = vmatprep.subr.bf16.mxu0 0
        %668 = vmatpush1.bf16.xpose.msra.mxu0 %v627
        %669 = vmatprep.subr.bf16.mxu0 0
        %670 = vmatpush1.bf16.xpose.msra.mxu0 %v628
        %671 = vmatprep.subr.bf16.mxu0 0
        %672 = vmatpush1.bf16.xpose.msra.mxu0 %v629
        %673 = vmatprep.subr.bf16.mxu0 0
        %674 = vmatpush1.bf16.xpose.msra.mxu0 %v630
        %675 = vmatprep.subr.bf16.mxu0 0
        %676 = vmatpush1.bf16.xpose.msra.mxu0 %v631
        %677 = vmatprep.subr.bf16.mxu0 0
        %678 = vmatpush1.bf16.xpose.msra.mxu0 %v632
        %679 = vmatprep.subr.bf16.mxu0 0
        %680 = vmatpush1.bf16.xpose.msra.mxu0 %v633
        %681 = vmatprep.subr.bf16.mxu0 0
        %682 = vmatpush1.bf16.xpose.msra.mxu0 %v634
        %683 = vmatprep.mubr.bf16.mxu0 0
        %684 = vmatmul.mubr.bf16.gmra.mrb[0].mxu0 %v539
        %v685 = vpop.f32.mrb[0].mxu0
        %v686 = vadd.f32 0.0, %v685
        %v687 = vpop.f32.mrb[0].mxu0
        %v688 = vadd.f32 0.0, %v687
        %v689 = vpop.f32.mrb[0].mxu0
        %v690 = vadd.f32 0.0, %v689
        %v691 = vpop.f32.mrb[0].mxu0
        %v692 = vadd.f32 0.0, %v691
        %693 = vmatprep.mubr.bf16.mxu0 0
        %694 = vmatmul.mubr.bf16.gmra.mrb[0].mxu0 %v540
        %v695 = vpop.f32.mrb[0].mxu0
        %v696 = vadd.f32 0.0, %v695
        %v697 = vpop.f32.mrb[0].mxu0
        %v698 = vadd.f32 0.0, %v697
        %v699 = vpop.f32.mrb[0].mxu0
        %v700 = vadd.f32 0.0, %v699
        %v701 = vpop.f32.mrb[0].mxu0
        %v702 = vadd.f32 0.0, %v701
        %703 = vmatprep.mubr.bf16.mxu0 0
        %704 = vmatmul.mubr.bf16.gmra.mrb[0].mxu0 %v541
        %v705 = vpop.f32.mrb[0].mxu0
        %v706 = vadd.f32 0.0, %v705
        %v707 = vpop.f32.mrb[0].mxu0
        %v708 = vadd.f32 0.0, %v707
        %v709 = vpop.f32.mrb[0].mxu0
        %v710 = vadd.f32 0.0, %v709
        %v711 = vpop.f32.mrb[0].mxu0
        %v712 = vadd.f32 0.0, %v711
        %713 = vmatprep.mubr.bf16.mxu0 0
        %714 = vmatmul.mubr.bf16.gmra.mrb[0].mxu0 %v542
        %v715 = vpop.f32.mrb[0].mxu0
        %v716 = vadd.f32 0.0, %v715
        %v717 = vpop.f32.mrb[0].mxu0
        %v718 = vadd.f32 0.0, %v717
        %v719 = vpop.f32.mrb[0].mxu0
        %v720 = vadd.f32 0.0, %v719
        %v721 = vpop.f32.mrb[0].mxu0
        %v722 = vadd.f32 0.0, %v721
        %723 = vmatprep.mubr.bf16.mxu0 0
        %724 = vmatmul.mubr.bf16.gmra.mrb[0].mxu0 %v543
        %v725 = vpop.f32.mrb[0].mxu0
        %v726 = vadd.f32 0.0, %v725
        %v727 = vpop.f32.mrb[0].mxu0
        %v728 = vadd.f32 0.0, %v727
        %v729 = vpop.f32.mrb[0].mxu0
        %v730 = vadd.f32 0.0, %v729
        %v731 = vpop.f32.mrb[0].mxu0
        %v732 = vadd.f32 0.0, %v731
        %733 = vmatprep.mubr.bf16.mxu0 0
        %734 = vmatmul.mubr.bf16.gmra.mrb[0].mxu0 %v544
        %v735 = vpop.f32.mrb[0].mxu0
        %v736 = vadd.f32 0.0, %v735
        %v737 = vpop.f32.mrb[0].mxu0
        %v738 = vadd.f32 0.0, %v737
        %v739 = vpop.f32.mrb[0].mxu0
        %v740 = vadd.f32 0.0, %v739
        %v741 = vpop.f32.mrb[0].mxu0
        %v742 = vadd.f32 0.0, %v741
        %743 = vmatprep.mubr.bf16.mxu0 0
        %744 = vmatmul.mubr.bf16.gmra.mrb[0].mxu0 %v545
        %v745 = vpop.f32.mrb[0].mxu0
        %v746 = vadd.f32 0.0, %v745
        %v747 = vpop.f32.mrb[0].mxu0
        %v748 = vadd.f32 0.0, %v747
        %v749 = vpop.f32.mrb[0].mxu0
        %v750 = vadd.f32 0.0, %v749
        %v751 = vpop.f32.mrb[0].mxu0
        %v752 = vadd.f32 0.0, %v751
        %753 = vmatprep.mubr.bf16.mxu0 0
        %754 = vmatmul.mubr.bf16.gmra.mrb[0].mxu0 %v546
        %v755 = vpop.f32.mrb[0].mxu0
        %v756 = vadd.f32 0.0, %v755
        %v757 = vpop.f32.mrb[0].mxu0
        %v758 = vadd.f32 0.0, %v757
        %v759 = vpop.f32.mrb[0].mxu0
        %v760 = vadd.f32 0.0, %v759
        %v761 = vpop.f32.mrb[0].mxu0
        %v762 = vadd.f32 0.0, %v761
        %763 = vdwg.mxu0
        %v764 = vmul.f32 %v686, 0.044194173
        %v765 = vmul.f32 %v688, 0.044194173
        %v766 = vmul.f32 %v690, 0.044194173
        %v767 = vmul.f32 %v692, 0.044194173
        %v768 = vmul.f32 %v696, 0.044194173
        %v769 = vmul.f32 %v698, 0.044194173
        %v770 = vmul.f32 %v700, 0.044194173
        %v771 = vmul.f32 %v702, 0.044194173
        %v772 = vmul.f32 %v706, 0.044194173
        %v773 = vmul.f32 %v708, 0.044194173
        %v774 = vmul.f32 %v710, 0.044194173
        %v775 = vmul.f32 %v712, 0.044194173
        %v776 = vmul.f32 %v716, 0.044194173
        %v777 = vmul.f32 %v718, 0.044194173
        %v778 = vmul.f32 %v720, 0.044194173
        %v779 = vmul.f32 %v722, 0.044194173
        %v780 = vmul.f32 %v726, 0.044194173
        %v781 = vmul.f32 %v728, 0.044194173
        %v782 = vmul.f32 %v730, 0.044194173
        %v783 = vmul.f32 %v732, 0.044194173
        %v784 = vmul.f32 %v736, 0.044194173
        %v785 = vmul.f32 %v738, 0.044194173
        %v786 = vmul.f32 %v740, 0.044194173
        %v787 = vmul.f32 %v742, 0.044194173
        %v788 = vmul.f32 %v746, 0.044194173
        %v789 = vmul.f32 %v748, 0.044194173
        %v790 = vmul.f32 %v750, 0.044194173
        %v791 = vmul.f32 %v752, 0.044194173
        %v792 = vmul.f32 %v756, 0.044194173
        %v793 = vmul.f32 %v758, 0.044194173
        %v794 = vmul.f32 %v760, 0.044194173
        %v795 = vmul.f32 %v762, 0.044194173
        %v796 = vld [vmem:[#allocation2] sm:$0xff]
        %v797 = vld [vmem:[#allocation2 + $0x8] sm:$0xff]
        %v798 = vld [vmem:[#allocation2 + $0x10] sm:$0xff]
        %v799 = vld [vmem:[#allocation2 + $0x18] sm:$0xff]
        %v800 = vld [vmem:[#allocation2 + $0x20] sm:$0xff]
        %v801 = vld [vmem:[#allocation2 + $0x28] sm:$0xff]
        %v802 = vld [vmem:[#allocation2 + $0x30] sm:$0xff]
        %v803 = vld [vmem:[#allocation2 + $0x38] sm:$0xff]
        %v804 = vld [vmem:[#allocation2 + $0x40] sm:$0xff]
        %v805 = vld [vmem:[#allocation2 + $0x48] sm:$0xff]
        %v806 = vld [vmem:[#allocation2 + $0x50] sm:$0xff]
        %v807 = vld [vmem:[#allocation2 + $0x58] sm:$0xff]
        %v808 = vld [vmem:[#allocation2 + $0x60] sm:$0xff]
        %v809 = vld [vmem:[#allocation2 + $0x68] sm:$0xff]
        %v810 = vld [vmem:[#allocation2 + $0x70] sm:$0xff]
        %v811 = vld [vmem:[#allocation2 + $0x78] sm:$0xff]
        %v812 = vmax.f32 %v764, %v765
        %813 = vmax.xlane.f32.xlu0 %v812
        %v814 = vpop.xlane.xlu0 %813
        %v815 = vmax.f32 %v766, %v767
        %816 = vmax.xlane.f32.xlu0 %v815
        %v817 = vpop.xlane.xlu0 %816
        %v818 = vmax.f32 %v768, %v769
        %819 = vmax.xlane.f32.xlu0 %v818
        %v820 = vpop.xlane.xlu0 %819
        %v821 = vmax.f32 %v770, %v771
        %822 = vmax.xlane.f32.xlu0 %v821
        %v823 = vpop.xlane.xlu0 %822
        %v824 = vmax.f32 %v772, %v773
        %825 = vmax.xlane.f32.xlu0 %v824
        %v826 = vpop.xlane.xlu0 %825
        %v827 = vmax.f32 %v774, %v775
        %828 = vmax.xlane.f32.xlu0 %v827
        %v829 = vpop.xlane.xlu0 %828
        %v830 = vmax.f32 %v776, %v777
        %831 = vmax.xlane.f32.xlu0 %v830
        %v832 = vpop.xlane.xlu0 %831
        %v833 = vmax.f32 %v778, %v779
        %834 = vmax.xlane.f32.xlu0 %v833
        %v835 = vpop.xlane.xlu0 %834
        %v836 = vmax.f32 %v780, %v781
        %837 = vmax.xlane.f32.xlu0 %v836
        %v838 = vpop.xlane.xlu0 %837
        %v839 = vmax.f32 %v782, %v783
        %840 = vmax.xlane.f32.xlu0 %v839
        %v841 = vpop.xlane.xlu0 %840
        %v842 = vmax.f32 %v784, %v785
        %843 = vmax.xlane.f32.xlu0 %v842
        %v844 = vpop.xlane.xlu0 %843
        %v845 = vmax.f32 %v786, %v787
        %846 = vmax.xlane.f32.xlu0 %v845
        %v847 = vpop.xlane.xlu0 %846
        %v848 = vmax.f32 %v788, %v789
        %849 = vmax.xlane.f32.xlu0 %v848
        %v850 = vpop.xlane.xlu0 %849
        %v851 = vmax.f32 %v790, %v791
        %852 = vmax.xlane.f32.xlu0 %v851
        %v853 = vpop.xlane.xlu0 %852
        %v854 = vmax.f32 %v792, %v793
        %855 = vmax.xlane.f32.xlu0 %v854
        %v856 = vpop.xlane.xlu0 %855
        %v857 = vmax.f32 %v794, %v795
        %858 = vmax.xlane.f32.xlu0 %v857
        %v859 = vpop.xlane.xlu0 %858
        %v860 = vmax.f32 %v796, %v814
        %v861 = vmax.f32 %v797, %v817
        %v862 = vmax.f32 %v798, %v820
        %v863 = vmax.f32 %v799, %v823
        %v864 = vmax.f32 %v800, %v826
        %v865 = vmax.f32 %v801, %v829
        %v866 = vmax.f32 %v802, %v832
        %v867 = vmax.f32 %v803, %v835
        %v868 = vmax.f32 %v804, %v838
        %v869 = vmax.f32 %v805, %v841
        %v870 = vmax.f32 %v806, %v844
        %v871 = vmax.f32 %v807, %v847
        %v872 = vmax.f32 %v808, %v850
        %v873 = vmax.f32 %v809, %v853
        %v874 = vmax.f32 %v810, %v856
        %v875 = vmax.f32 %v811, %v859
        %v876 = vsub.f32 %v796, %v860
        %v877 = vsub.f32 %v797, %v861
        %v878 = vsub.f32 %v798, %v862
        %v879 = vsub.f32 %v799, %v863
        %v880 = vsub.f32 %v800, %v864
        %v881 = vsub.f32 %v801, %v865
        %v882 = vsub.f32 %v802, %v866
        %v883 = vsub.f32 %v803, %v867
        %v884 = vsub.f32 %v804, %v868
        %v885 = vsub.f32 %v805, %v869
        %v886 = vsub.f32 %v806, %v870
        %v887 = vsub.f32 %v807, %v871
        %v888 = vsub.f32 %v808, %v872
        %v889 = vsub.f32 %v809, %v873
        %v890 = vsub.f32 %v810, %v874
        %v891 = vsub.f32 %v811, %v875
        %v892 = vmul.f32 %v876, 1.442695
        %v893 = vpow.pop %v892
        %v894 = vmul.f32 %v877, 1.442695
        %v895 = vpow.pop %v894
        %v896 = vmul.f32 %v878, 1.442695
        %v897 = vpow.pop %v896
        %v898 = vmul.f32 %v879, 1.442695
        %v899 = vpow.pop %v898
        %v900 = vmul.f32 %v880, 1.442695
        %v901 = vpow.pop %v900
        %v902 = vmul.f32 %v881, 1.442695
        %v903 = vpow.pop %v902
        %v904 = vmul.f32 %v882, 1.442695
        %v905 = vpow.pop %v904
        %v906 = vmul.f32 %v883, 1.442695
        %v907 = vpow.pop %v906
        %v908 = vmul.f32 %v884, 1.442695
        %v909 = vpow.pop %v908
        %v910 = vmul.f32 %v885, 1.442695
        %v911 = vpow.pop %v910
        %v912 = vmul.f32 %v886, 1.442695
        %v913 = vpow.pop %v912
        %v914 = vmul.f32 %v887, 1.442695
        %v915 = vpow.pop %v914
        %v916 = vmul.f32 %v888, 1.442695
        %v917 = vpow.pop %v916
        %v918 = vmul.f32 %v889, 1.442695
        %v919 = vpow.pop %v918
        %v920 = vmul.f32 %v890, 1.442695
        %v921 = vpow.pop %v920
        %v922 = vmul.f32 %v891, 1.442695
        %v923 = vpow.pop %v922
        %925 = vset.pattern.permute.xlu0 0
        %926 = vperm.xlu0 %925, %v860
        %v927 = vpop.permute.xlu0 %926
        %930 = vset.pattern.permute.xlu0 0
        %931 = vperm.xlu0 %930, %v861
        %v932 = vpop.permute.xlu0 %931
        %935 = vset.pattern.permute.xlu0 0
        %936 = vperm.xlu0 %935, %v862
        %v937 = vpop.permute.xlu0 %936
        %940 = vset.pattern.permute.xlu0 0
        %941 = vperm.xlu0 %940, %v863
        %v942 = vpop.permute.xlu0 %941
        %945 = vset.pattern.permute.xlu0 0
        %946 = vperm.xlu0 %945, %v864
        %v947 = vpop.permute.xlu0 %946
        %950 = vset.pattern.permute.xlu0 0
        %951 = vperm.xlu0 %950, %v865
        %v952 = vpop.permute.xlu0 %951
        %955 = vset.pattern.permute.xlu0 0
        %956 = vperm.xlu0 %955, %v866
        %v957 = vpop.permute.xlu0 %956
        %960 = vset.pattern.permute.xlu0 0
        %961 = vperm.xlu0 %960, %v867
        %v962 = vpop.permute.xlu0 %961
        %965 = vset.pattern.permute.xlu0 0
        %966 = vperm.xlu0 %965, %v868
        %v967 = vpop.permute.xlu0 %966
        %970 = vset.pattern.permute.xlu0 0
        %971 = vperm.xlu0 %970, %v869
        %v972 = vpop.permute.xlu0 %971
        %975 = vset.pattern.permute.xlu0 0
        %976 = vperm.xlu0 %975, %v870
        %v977 = vpop.permute.xlu0 %976
        %980 = vset.pattern.permute.xlu0 0
        %981 = vperm.xlu0 %980, %v871
        %v982 = vpop.permute.xlu0 %981
        %985 = vset.pattern.permute.xlu0 0
        %986 = vperm.xlu0 %985, %v872
        %v987 = vpop.permute.xlu0 %986
        %990 = vset.pattern.permute.xlu0 0
        %991 = vperm.xlu0 %990, %v873
        %v992 = vpop.permute.xlu0 %991
        %995 = vset.pattern.permute.xlu0 0
        %996 = vperm.xlu0 %995, %v874
        %v997 = vpop.permute.xlu0 %996
        %1000 = vset.pattern.permute.xlu0 0
        %1001 = vperm.xlu0 %1000, %v875
        %v1002 = vpop.permute.xlu0 %1001
        %v1004 = vsub.f32 %v764, %v927
        %v1005 = vsub.f32 %v765, %v927
        %v1006 = vsub.f32 %v766, %v932
        %v1007 = vsub.f32 %v767, %v932
        %v1008 = vsub.f32 %v768, %v937
        %v1009 = vsub.f32 %v769, %v937
        %v1010 = vsub.f32 %v770, %v942
        %v1011 = vsub.f32 %v771, %v942
        %v1012 = vsub.f32 %v772, %v947
        %v1013 = vsub.f32 %v773, %v947
        %v1014 = vsub.f32 %v774, %v952
        %v1015 = vsub.f32 %v775, %v952
        %v1016 = vsub.f32 %v776, %v957
        %v1017 = vsub.f32 %v777, %v957
        %v1018 = vsub.f32 %v778, %v962
        %v1019 = vsub.f32 %v779, %v962
        %v1020 = vsub.f32 %v780, %v967
        %v1021 = vsub.f32 %v781, %v967
        %v1022 = vsub.f32 %v782, %v972
        %v1023 = vsub.f32 %v783, %v972
        %v1024 = vsub.f32 %v784, %v977
        %v1025 = vsub.f32 %v785, %v977
        %v1026 = vsub.f32 %v786, %v982
        %v1027 = vsub.f32 %v787, %v982
        %v1028 = vsub.f32 %v788, %v987
        %v1029 = vsub.f32 %v789, %v987
        %v1030 = vsub.f32 %v790, %v992
        %v1031 = vsub.f32 %v791, %v992
        %v1032 = vsub.f32 %v792, %v997
        %v1033 = vsub.f32 %v793, %v997
        %v1034 = vsub.f32 %v794, %v1002
        %v1035 = vsub.f32 %v795, %v1002
        %v1036 = vmul.f32 %v1004, 1.442695
        %v1037 = vpow.pop %v1036
        %v1038 = vmul.f32 %v1005, 1.442695
        %v1039 = vpow.pop %v1038
        %v1040 = vmul.f32 %v1006, 1.442695
        %v1041 = vpow.pop %v1040
        %v1042 = vmul.f32 %v1007, 1.442695
        %v1043 = vpow.pop %v1042
        %v1044 = vmul.f32 %v1008, 1.442695
        %v1045 = vpow.pop %v1044
        %v1046 = vmul.f32 %v1009, 1.442695
        %v1047 = vpow.pop %v1046
        %v1048 = vmul.f32 %v1010, 1.442695
        %v1049 = vpow.pop %v1048
        %v1050 = vmul.f32 %v1011, 1.442695
        %v1051 = vpow.pop %v1050
        %v1052 = vmul.f32 %v1012, 1.442695
        %v1053 = vpow.pop %v1052
        %v1054 = vmul.f32 %v1013, 1.442695
        %v1055 = vpow.pop %v1054
        %v1056 = vmul.f32 %v1014, 1.442695
        %v1057 = vpow.pop %v1056
        %v1058 = vmul.f32 %v1015, 1.442695
        %v1059 = vpow.pop %v1058
        %v1060 = vmul.f32 %v1016, 1.442695
        %v1061 = vpow.pop %v1060
        %v1062 = vmul.f32 %v1017, 1.442695
        %v1063 = vpow.pop %v1062
        %v1064 = vmul.f32 %v1018, 1.442695
        %v1065 = vpow.pop %v1064
        %v1066 = vmul.f32 %v1019, 1.442695
        %v1067 = vpow.pop %v1066
        %v1068 = vmul.f32 %v1020, 1.442695
        %v1069 = vpow.pop %v1068
        %v1070 = vmul.f32 %v1021, 1.442695
        %v1071 = vpow.pop %v1070
        %v1072 = vmul.f32 %v1022, 1.442695
        %v1073 = vpow.pop %v1072
        %v1074 = vmul.f32 %v1023, 1.442695
        %v1075 = vpow.pop %v1074
        %v1076 = vmul.f32 %v1024, 1.442695
        %v1077 = vpow.pop %v1076
        %v1078 = vmul.f32 %v1025, 1.442695
        %v1079 = vpow.pop %v1078
        %v1080 = vmul.f32 %v1026, 1.442695
        %v1081 = vpow.pop %v1080
        %v1082 = vmul.f32 %v1027, 1.442695
        %v1083 = vpow.pop %v1082
        %v1084 = vmul.f32 %v1028, 1.442695
        %v1085 = vpow.pop %v1084
        %v1086 = vmul.f32 %v1029, 1.442695
        %v1087 = vpow.pop %v1086
        %v1088 = vmul.f32 %v1030, 1.442695
        %v1089 = vpow.pop %v1088
        %v1090 = vmul.f32 %v1031, 1.442695
        %v1091 = vpow.pop %v1090
        %v1092 = vmul.f32 %v1032, 1.442695
        %v1093 = vpow.pop %v1092
        %v1094 = vmul.f32 %v1033, 1.442695
        %v1095 = vpow.pop %v1094
        %v1096 = vmul.f32 %v1034, 1.442695
        %v1097 = vpow.pop %v1096
        %v1098 = vmul.f32 %v1035, 1.442695
        %v1099 = vpow.pop %v1098
        %v1100 = vld [vmem:[#allocation3] sm:$0xff]
        %v1101 = vld [vmem:[#allocation3 + $0x8] sm:$0xff]
        %v1102 = vld [vmem:[#allocation3 + $0x10] sm:$0xff]
        %v1103 = vld [vmem:[#allocation3 + $0x18] sm:$0xff]
        %v1104 = vld [vmem:[#allocation3 + $0x20] sm:$0xff]
        %v1105 = vld [vmem:[#allocation3 + $0x28] sm:$0xff]
        %v1106 = vld [vmem:[#allocation3 + $0x30] sm:$0xff]
        %v1107 = vld [vmem:[#allocation3 + $0x38] sm:$0xff]
        %v1108 = vld [vmem:[#allocation3 + $0x40] sm:$0xff]
        %v1109 = vld [vmem:[#allocation3 + $0x48] sm:$0xff]
        %v1110 = vld [vmem:[#allocation3 + $0x50] sm:$0xff]
        %v1111 = vld [vmem:[#allocation3 + $0x58] sm:$0xff]
        %v1112 = vld [vmem:[#allocation3 + $0x60] sm:$0xff]
        %v1113 = vld [vmem:[#allocation3 + $0x68] sm:$0xff]
        %v1114 = vld [vmem:[#allocation3 + $0x70] sm:$0xff]
        %v1115 = vld [vmem:[#allocation3 + $0x78] sm:$0xff]
        %v1116 = vmul.f32 %v893, %v1100
        %v1117 = vmul.f32 %v895, %v1101
        %v1118 = vmul.f32 %v897, %v1102
        %v1119 = vmul.f32 %v899, %v1103
        %v1120 = vmul.f32 %v901, %v1104
        %v1121 = vmul.f32 %v903, %v1105
        %v1122 = vmul.f32 %v905, %v1106
        %v1123 = vmul.f32 %v907, %v1107
        %v1124 = vmul.f32 %v909, %v1108
        %v1125 = vmul.f32 %v911, %v1109
        %v1126 = vmul.f32 %v913, %v1110
        %v1127 = vmul.f32 %v915, %v1111
        %v1128 = vmul.f32 %v917, %v1112
        %v1129 = vmul.f32 %v919, %v1113
        %v1130 = vmul.f32 %v921, %v1114
        %v1131 = vmul.f32 %v923, %v1115
        %v1132 = vadd.f32 %v1037, %v1039
        %1133 = vadd.xlane.f32.xlu0 %v1132
        %v1134 = vpop.xlane.xlu0 %1133
        %v1135 = vadd.f32 %v1041, %v1043
        %1136 = vadd.xlane.f32.xlu0 %v1135
        %v1137 = vpop.xlane.xlu0 %1136
        %v1138 = vadd.f32 %v1045, %v1047
        %1139 = vadd.xlane.f32.xlu0 %v1138
        %v1140 = vpop.xlane.xlu0 %1139
        %v1141 = vadd.f32 %v1049, %v1051
        %1142 = vadd.xlane.f32.xlu0 %v1141
        %v1143 = vpop.xlane.xlu0 %1142
        %v1144 = vadd.f32 %v1053, %v1055
        %1145 = vadd.xlane.f32.xlu0 %v1144
        %v1146 = vpop.xlane.xlu0 %1145
        %v1147 = vadd.f32 %v1057, %v1059
        %1148 = vadd.xlane.f32.xlu0 %v1147
        %v1149 = vpop.xlane.xlu0 %1148
        %v1150 = vadd.f32 %v1061, %v1063
        %1151 = vadd.xlane.f32.xlu0 %v1150
        %v1152 = vpop.xlane.xlu0 %1151
        %v1153 = vadd.f32 %v1065, %v1067
        %1154 = vadd.xlane.f32.xlu0 %v1153
        %v1155 = vpop.xlane.xlu0 %1154
        %v1156 = vadd.f32 %v1069, %v1071
        %1157 = vadd.xlane.f32.xlu0 %v1156
        %v1158 = vpop.xlane.xlu0 %1157
        %v1159 = vadd.f32 %v1073, %v1075
        %1160 = vadd.xlane.f32.xlu0 %v1159
        %v1161 = vpop.xlane.xlu0 %1160
        %v1162 = vadd.f32 %v1077, %v1079
        %1163 = vadd.xlane.f32.xlu0 %v1162
        %v1164 = vpop.xlane.xlu0 %1163
        %v1165 = vadd.f32 %v1081, %v1083
        %1166 = vadd.xlane.f32.xlu0 %v1165
        %v1167 = vpop.xlane.xlu0 %1166
        %v1168 = vadd.f32 %v1085, %v1087
        %1169 = vadd.xlane.f32.xlu0 %v1168
        %v1170 = vpop.xlane.xlu0 %1169
        %v1171 = vadd.f32 %v1089, %v1091
        %1172 = vadd.xlane.f32.xlu0 %v1171
        %v1173 = vpop.xlane.xlu0 %1172
        %v1174 = vadd.f32 %v1093, %v1095
        %1175 = vadd.xlane.f32.xlu0 %v1174
        %v1176 = vpop.xlane.xlu0 %1175
        %v1177 = vadd.f32 %v1097, %v1099
        %1178 = vadd.xlane.f32.xlu0 %v1177
        %v1179 = vpop.xlane.xlu0 %1178
        %v1180 = vadd.f32 %v1116, %v1134
        %v1181 = vadd.f32 %v1117, %v1137
        %v1182 = vadd.f32 %v1118, %v1140
        %v1183 = vadd.f32 %v1119, %v1143
        %v1184 = vadd.f32 %v1120, %v1146
        %v1185 = vadd.f32 %v1121, %v1149
        %v1186 = vadd.f32 %v1122, %v1152
        %v1187 = vadd.f32 %v1123, %v1155
        %v1188 = vadd.f32 %v1124, %v1158
        %v1189 = vadd.f32 %v1125, %v1161
        %v1190 = vadd.f32 %v1126, %v1164
        %v1191 = vadd.f32 %v1127, %v1167
        %v1192 = vadd.f32 %v1128, %v1170
        %v1193 = vadd.f32 %v1129, %v1173
        %v1194 = vadd.f32 %v1130, %v1176
        %v1195 = vadd.f32 %v1131, %v1179
        %vm1196 = vcmask 7168
        %1197 = vst.msk [vmem:[#allocation3] sm:$0xff] %vm1196, %v1180
        %1198 = vst.msk [vmem:[#allocation3 + $0x8] sm:$0xff] %vm1196, %v1181
        %1199 = vst.msk [vmem:[#allocation3 + $0x10] sm:$0xff] %vm1196, %v1182
        %1200 = vst.msk [vmem:[#allocation3 + $0x18] sm:$0xff] %vm1196, %v1183
        %1201 = vst.msk [vmem:[#allocation3 + $0x20] sm:$0xff] %vm1196, %v1184
        %1202 = vst.msk [vmem:[#allocation3 + $0x28] sm:$0xff] %vm1196, %v1185
        %1203 = vst.msk [vmem:[#allocation3 + $0x30] sm:$0xff] %vm1196, %v1186
        %1204 = vst.msk [vmem:[#allocation3 + $0x38] sm:$0xff] %vm1196, %v1187
        %1205 = vst.msk [vmem:[#allocation3 + $0x40] sm:$0xff] %vm1196, %v1188
        %1206 = vst.msk [vmem:[#allocation3 + $0x48] sm:$0xff] %vm1196, %v1189
        %1207 = vst.msk [vmem:[#allocation3 + $0x50] sm:$0xff] %vm1196, %v1190
        %1208 = vst.msk [vmem:[#allocation3 + $0x58] sm:$0xff] %vm1196, %v1191
        %1209 = vst.msk [vmem:[#allocation3 + $0x60] sm:$0xff] %vm1196, %v1192
        %1210 = vst.msk [vmem:[#allocation3 + $0x68] sm:$0xff] %vm1196, %v1193
        %1211 = vst.msk [vmem:[#allocation3 + $0x70] sm:$0xff] %vm1196, %v1194
        %1212 = vst.msk [vmem:[#allocation3 + $0x78] sm:$0xff] %vm1196, %v1195
        %v1213 = vld [vmem:[%s328] sm:$0x3]
        %v1215 = vlaneseq
        %v1216 = vshrl.u32 %v1215, 7
        %v1217 = vsub.s32 0, %v1216
        %v1218 = vrot.slane %v1213, %v1217
        %v1219 = vlaneseq
        %v1220 = vshrl.u32 %v1219, 7
        %v1221 = vsub.s32 1, %v1220
        %v1222 = vrot.slane %v1213, %v1221
        %v1225 = vmul.f32 %v1037, %v1218
        %v1226 = vmul.f32 %v1039, %v1222
        %v1227 = vmul.f32 %v1041, %v1218
        %v1228 = vmul.f32 %v1043, %v1222
        %v1229 = vmul.f32 %v1045, %v1218
        %v1230 = vmul.f32 %v1047, %v1222
        %v1231 = vmul.f32 %v1049, %v1218
        %v1232 = vmul.f32 %v1051, %v1222
        %v1233 = vmul.f32 %v1053, %v1218
        %v1234 = vmul.f32 %v1055, %v1222
        %v1235 = vmul.f32 %v1057, %v1218
        %v1236 = vmul.f32 %v1059, %v1222
        %v1237 = vmul.f32 %v1061, %v1218
        %v1238 = vmul.f32 %v1063, %v1222
        %v1239 = vmul.f32 %v1065, %v1218
        %v1240 = vmul.f32 %v1067, %v1222
        %v1241 = vmul.f32 %v1069, %v1218
        %v1242 = vmul.f32 %v1071, %v1222
        %v1243 = vmul.f32 %v1073, %v1218
        %v1244 = vmul.f32 %v1075, %v1222
        %v1245 = vmul.f32 %v1077, %v1218
        %v1246 = vmul.f32 %v1079, %v1222
        %v1247 = vmul.f32 %v1081, %v1218
        %v1248 = vmul.f32 %v1083, %v1222
        %v1249 = vmul.f32 %v1085, %v1218
        %v1250 = vmul.f32 %v1087, %v1222
        %v1251 = vmul.f32 %v1089, %v1218
        %v1252 = vmul.f32 %v1091, %v1222
        %v1253 = vmul.f32 %v1093, %v1218
        %v1254 = vmul.f32 %v1095, %v1222
        %v1255 = vmul.f32 %v1097, %v1218
        %v1256 = vmul.f32 %v1099, %v1222
        %v1257 = vpack.c.bf16 %v1227, %v1225
        %v1258 = vpack.c.bf16 %v1228, %v1226
        %v1259 = vpack.c.bf16 %v1231, %v1229
        %v1260 = vpack.c.bf16 %v1232, %v1230
        %v1261 = vpack.c.bf16 %v1235, %v1233
        %v1262 = vpack.c.bf16 %v1236, %v1234
        %v1263 = vpack.c.bf16 %v1239, %v1237
        %v1264 = vpack.c.bf16 %v1240, %v1238
        %v1265 = vpack.c.bf16 %v1243, %v1241
        %v1266 = vpack.c.bf16 %v1244, %v1242
        %v1267 = vpack.c.bf16 %v1247, %v1245
        %v1268 = vpack.c.bf16 %v1248, %v1246
        %v1269 = vpack.c.bf16 %v1251, %v1249
        %v1270 = vpack.c.bf16 %v1252, %v1250
        %v1271 = vpack.c.bf16 %v1255, %v1253
        %v1272 = vpack.c.bf16 %v1256, %v1254
        %v1273 = vld [vmem:[#allocation4] sm:$0xff]
        %v1274 = vld [vmem:[#allocation4 + $0x8] sm:$0xff]
        %v1275 = vld [vmem:[#allocation4 + $0x10] sm:$0xff]
        %v1276 = vld [vmem:[#allocation4 + $0x18] sm:$0xff]
        %v1277 = vld [vmem:[#allocation4 + $0x20] sm:$0xff]
        %v1278 = vld [vmem:[#allocation4 + $0x28] sm:$0xff]
        %v1279 = vld [vmem:[#allocation4 + $0x30] sm:$0xff]
        %v1280 = vld [vmem:[#allocation4 + $0x38] sm:$0xff]
        %v1281 = vld [vmem:[#allocation4 + $0x40] sm:$0xff]
        %v1282 = vld [vmem:[#allocation4 + $0x48] sm:$0xff]
        %v1283 = vld [vmem:[#allocation4 + $0x50] sm:$0xff]
        %v1284 = vld [vmem:[#allocation4 + $0x58] sm:$0xff]
        %v1285 = vld [vmem:[#allocation4 + $0x60] sm:$0xff]
        %v1286 = vld [vmem:[#allocation4 + $0x68] sm:$0xff]
        %v1287 = vld [vmem:[#allocation4 + $0x70] sm:$0xff]
        %v1288 = vld [vmem:[#allocation4 + $0x78] sm:$0xff]
        %1290 = vset.pattern.permute.xlu0 0
        %1291 = vperm.xlu0 %1290, %v893
        %v1292 = vpop.permute.xlu0 %1291
        %1295 = vset.pattern.permute.xlu0 0
        %1296 = vperm.xlu0 %1295, %v895
        %v1297 = vpop.permute.xlu0 %1296
        %1300 = vset.pattern.permute.xlu0 0
        %1301 = vperm.xlu0 %1300, %v897
        %v1302 = vpop.permute.xlu0 %1301
        %1305 = vset.pattern.permute.xlu0 0
        %1306 = vperm.xlu0 %1305, %v899
        %v1307 = vpop.permute.xlu0 %1306
        %1310 = vset.pattern.permute.xlu0 0
        %1311 = vperm.xlu0 %1310, %v901
        %v1312 = vpop.permute.xlu0 %1311
        %1315 = vset.pattern.permute.xlu0 0
        %1316 = vperm.xlu0 %1315, %v903
        %v1317 = vpop.permute.xlu0 %1316
        %1320 = vset.pattern.permute.xlu0 0
        %1321 = vperm.xlu0 %1320, %v905
        %v1322 = vpop.permute.xlu0 %1321
        %1325 = vset.pattern.permute.xlu0 0
        %1326 = vperm.xlu0 %1325, %v907
        %v1327 = vpop.permute.xlu0 %1326
        %1330 = vset.pattern.permute.xlu0 0
        %1331 = vperm.xlu0 %1330, %v909
        %v1332 = vpop.permute.xlu0 %1331
        %1335 = vset.pattern.permute.xlu0 0
        %1336 = vperm.xlu0 %1335, %v911
        %v1337 = vpop.permute.xlu0 %1336
        %1340 = vset.pattern.permute.xlu0 0
        %1341 = vperm.xlu0 %1340, %v913
        %v1342 = vpop.permute.xlu0 %1341
        %1345 = vset.pattern.permute.xlu0 0
        %1346 = vperm.xlu0 %1345, %v915
        %v1347 = vpop.permute.xlu0 %1346
        %1350 = vset.pattern.permute.xlu0 0
        %1351 = vperm.xlu0 %1350, %v917
        %v1352 = vpop.permute.xlu0 %1351
        %1355 = vset.pattern.permute.xlu0 0
        %1356 = vperm.xlu0 %1355, %v919
        %v1357 = vpop.permute.xlu0 %1356
        %1360 = vset.pattern.permute.xlu0 0
        %1361 = vperm.xlu0 %1360, %v921
        %v1362 = vpop.permute.xlu0 %1361
        %1365 = vset.pattern.permute.xlu0 0
        %1366 = vperm.xlu0 %1365, %v923
        %v1367 = vpop.permute.xlu0 %1366
        %v1369 = vmul.f32 %v1292, %v1273
        %v1370 = vmul.f32 %v1297, %v1274
        %v1371 = vmul.f32 %v1302, %v1275
        %v1372 = vmul.f32 %v1307, %v1276
        %v1373 = vmul.f32 %v1312, %v1277
        %v1374 = vmul.f32 %v1317, %v1278
        %v1375 = vmul.f32 %v1322, %v1279
        %v1376 = vmul.f32 %v1327, %v1280
        %v1377 = vmul.f32 %v1332, %v1281
        %v1378 = vmul.f32 %v1337, %v1282
        %v1379 = vmul.f32 %v1342, %v1283
        %v1380 = vmul.f32 %v1347, %v1284
        %v1381 = vmul.f32 %v1352, %v1285
        %v1382 = vmul.f32 %v1357, %v1286
        %v1383 = vmul.f32 %v1362, %v1287
        %v1384 = vmul.f32 %v1367, %v1288
        %v1417 = vunpack.c.l.b16 %v475
        %v1418 = vunpack.c.l.b16 %v476
        %v1419 = vunpack.c.l.b16 %v477
        %v1420 = vunpack.c.l.b16 %v478
        %v1421 = vunpack.c.l.b16 %v479
        %v1422 = vunpack.c.l.b16 %v480
        %v1423 = vunpack.c.l.b16 %v481
        %v1424 = vunpack.c.l.b16 %v482
        %v1425 = vunpack.c.l.b16 %v483
        %v1426 = vunpack.c.l.b16 %v484
        %v1427 = vunpack.c.l.b16 %v485
        %v1428 = vunpack.c.l.b16 %v486
        %v1429 = vunpack.c.l.b16 %v487
        %v1430 = vunpack.c.l.b16 %v488
        %v1431 = vunpack.c.l.b16 %v489
        %v1432 = vunpack.c.l.b16 %v490
        %v1433 = vunpack.c.l.b16 %v491
        %v1434 = vunpack.c.l.b16 %v492
        %v1435 = vunpack.c.l.b16 %v493
        %v1436 = vunpack.c.l.b16 %v494
        %v1437 = vunpack.c.l.b16 %v495
        %v1438 = vunpack.c.l.b16 %v496
        %v1439 = vunpack.c.l.b16 %v497
        %v1440 = vunpack.c.l.b16 %v498
        %v1441 = vunpack.c.l.b16 %v499
        %v1442 = vunpack.c.l.b16 %v500
        %v1443 = vunpack.c.l.b16 %v501
        %v1444 = vunpack.c.l.b16 %v502
        %v1445 = vunpack.c.l.b16 %v503
        %v1446 = vunpack.c.l.b16 %v504
        %v1447 = vunpack.c.l.b16 %v505
        %v1448 = vunpack.c.l.b16 %v506
        %v1449 = vpack.c.b16 %v1418, %v1417
        %v1450 = vpack.c.b16 %v1420, %v1419
        %v1451 = vpack.c.b16 %v1422, %v1421
        %v1452 = vpack.c.b16 %v1424, %v1423
        %v1453 = vpack.c.b16 %v1426, %v1425
        %v1454 = vpack.c.b16 %v1428, %v1427
        %v1455 = vpack.c.b16 %v1430, %v1429
        %v1456 = vpack.c.b16 %v1432, %v1431
        %v1457 = vpack.c.b16 %v1434, %v1433
        %v1458 = vpack.c.b16 %v1436, %v1435
        %v1459 = vpack.c.b16 %v1438, %v1437
        %v1460 = vpack.c.b16 %v1440, %v1439
        %v1461 = vpack.c.b16 %v1442, %v1441
        %v1462 = vpack.c.b16 %v1444, %v1443
        %v1463 = vpack.c.b16 %v1446, %v1445
        %v1464 = vpack.c.b16 %v1448, %v1447
        %1481 = vmatprep.subr.bf16.mxu0 0
        %1482 = vmatpush1.bf16.msra.mxu0 %v1449
        %1483 = vmatprep.subr.bf16.mxu0 0
        %1484 = vmatpush1.bf16.msra.mxu0 %v1450
        %1485 = vmatprep.subr.bf16.mxu0 0
        %1486 = vmatpush1.bf16.msra.mxu0 %v1451
        %1487 = vmatprep.subr.bf16.mxu0 0
        %1488 = vmatpush1.bf16.msra.mxu0 %v1452
        %1489 = vmatprep.subr.bf16.mxu0 0
        %1490 = vmatpush1.bf16.msra.mxu0 %v1453
        %1491 = vmatprep.subr.bf16.mxu0 0
        %1492 = vmatpush1.bf16.msra.mxu0 %v1454
        %1493 = vmatprep.subr.bf16.mxu0 0
        %1494 = vmatpush1.bf16.msra.mxu0 %v1455
        %1495 = vmatprep.subr.bf16.mxu0 0
        %1496 = vmatpush1.bf16.msra.mxu0 %v1456
        %1497 = vmatprep.subr.bf16.mxu0 0
        %1498 = vmatpush1.bf16.msra.mxu0 %v1457
        %1499 = vmatprep.subr.bf16.mxu0 0
        %1500 = vmatpush1.bf16.msra.mxu0 %v1458
        %1501 = vmatprep.subr.bf16.mxu0 0
        %1502 = vmatpush1.bf16.msra.mxu0 %v1459
        %1503 = vmatprep.subr.bf16.mxu0 0
        %1504 = vmatpush1.bf16.msra.mxu0 %v1460
        %1505 = vmatprep.subr.bf16.mxu0 0
        %1506 = vmatpush1.bf16.msra.mxu0 %v1461
        %1507 = vmatprep.subr.bf16.mxu0 0
        %1508 = vmatpush1.bf16.msra.mxu0 %v1462
        %1509 = vmatprep.subr.bf16.mxu0 0
        %1510 = vmatpush1.bf16.msra.mxu0 %v1463
        %1511 = vmatprep.subr.bf16.mxu0 0
        %1512 = vmatpush1.bf16.msra.mxu0 %v1464
        %1513 = vmatprep.mubr.bf16.mxu0 %v1258
        %1514 = vmatmul.mubr.bf16.gmra.mrb[0].mxu0 %v1257
        %v1515 = vpop.f32.mrb[0].mxu0
        %v1516 = vadd.f32 0.0, %v1515
        %v1517 = vpop.f32.mrb[0].mxu0
        %v1518 = vpop.f32.mrb[0].mxu0
        %v1519 = vadd.f32 0.0, %v1518
        %v1520 = vpop.f32.mrb[0].mxu0
        %1521 = vmatprep.mubr.bf16.mxu0 %v1260
        %1522 = vmatmul.mubr.bf16.gmra.mrb[0].mxu0 %v1259
        %v1523 = vpop.f32.mrb[0].mxu0
        %v1524 = vadd.f32 0.0, %v1523
        %v1525 = vpop.f32.mrb[0].mxu0
        %v1526 = vpop.f32.mrb[0].mxu0
        %v1527 = vadd.f32 0.0, %v1526
        %v1528 = vpop.f32.mrb[0].mxu0
        %1529 = vmatprep.mubr.bf16.mxu0 %v1262
        %1530 = vmatmul.mubr.bf16.gmra.mrb[0].mxu0 %v1261
        %v1531 = vpop.f32.mrb[0].mxu0
        %v1532 = vadd.f32 0.0, %v1531
        %v1533 = vpop.f32.mrb[0].mxu0
        %v1534 = vpop.f32.mrb[0].mxu0
        %v1535 = vadd.f32 0.0, %v1534
        %v1536 = vpop.f32.mrb[0].mxu0
        %1537 = vmatprep.mubr.bf16.mxu0 %v1264
        %1538 = vmatmul.mubr.bf16.gmra.mrb[0].mxu0 %v1263
        %v1539 = vpop.f32.mrb[0].mxu0
        %v1540 = vadd.f32 0.0, %v1539
        %v1541 = vpop.f32.mrb[0].mxu0
        %v1542 = vpop.f32.mrb[0].mxu0
        %v1543 = vadd.f32 0.0, %v1542
        %v1544 = vpop.f32.mrb[0].mxu0
        %1545 = vmatprep.mubr.bf16.mxu0 %v1266
        %1546 = vmatmul.mubr.bf16.gmra.mrb[0].mxu0 %v1265
        %v1547 = vpop.f32.mrb[0].mxu0
        %v1548 = vadd.f32 0.0, %v1547
        %v1549 = vpop.f32.mrb[0].mxu0
        %v1550 = vpop.f32.mrb[0].mxu0
        %v1551 = vadd.f32 0.0, %v1550
        %v1552 = vpop.f32.mrb[0].mxu0
        %1553 = vmatprep.mubr.bf16.mxu0 %v1268
        %1554 = vmatmul.mubr.bf16.gmra.mrb[0].mxu0 %v1267
        %v1555 = vpop.f32.mrb[0].mxu0
        %v1556 = vadd.f32 0.0, %v1555
        %v1557 = vpop.f32.mrb[0].mxu0
        %v1558 = vpop.f32.mrb[0].mxu0
        %v1559 = vadd.f32 0.0, %v1558
        %v1560 = vpop.f32.mrb[0].mxu0
        %1561 = vmatprep.mubr.bf16.mxu0 %v1270
        %1562 = vmatmul.mubr.bf16.gmra.mrb[0].mxu0 %v1269
        %v1563 = vpop.f32.mrb[0].mxu0
        %v1564 = vadd.f32 0.0, %v1563
        %v1565 = vpop.f32.mrb[0].mxu0
        %v1566 = vpop.f32.mrb[0].mxu0
        %v1567 = vadd.f32 0.0, %v1566
        %v1568 = vpop.f32.mrb[0].mxu0
        %1569 = vmatprep.mubr.bf16.mxu0 %v1272
        %1570 = vmatmul.mubr.bf16.gmra.mrb[0].mxu0 %v1271
        %v1571 = vpop.f32.mrb[0].mxu0
        %v1572 = vadd.f32 0.0, %v1571
        %v1573 = vpop.f32.mrb[0].mxu0
        %v1574 = vpop.f32.mrb[0].mxu0
        %v1575 = vadd.f32 0.0, %v1574
        %v1576 = vpop.f32.mrb[0].mxu0
        %1577 = vdwg.mxu0
        %v1578 = vadd.f32 %v1369, %v1516
        %v1579 = vadd.f32 %v1370, %v1519
        %v1580 = vadd.f32 %v1371, %v1524
        %v1581 = vadd.f32 %v1372, %v1527
        %v1582 = vadd.f32 %v1373, %v1532
        %v1583 = vadd.f32 %v1374, %v1535
        %v1584 = vadd.f32 %v1375, %v1540
        %v1585 = vadd.f32 %v1376, %v1543
        %v1586 = vadd.f32 %v1377, %v1548
        %v1587 = vadd.f32 %v1378, %v1551
        %v1588 = vadd.f32 %v1379, %v1556
        %v1589 = vadd.f32 %v1380, %v1559
        %v1590 = vadd.f32 %v1381, %v1564
        %v1591 = vadd.f32 %v1382, %v1567
        %v1592 = vadd.f32 %v1383, %v1572
        %v1593 = vadd.f32 %v1384, %v1575
        %1594 = vst [vmem:[#allocation4] sm:$0xff] %v1578
        %1595 = vst [vmem:[#allocation4 + $0x8] sm:$0xff] %v1579
        %1596 = vst [vmem:[#allocation4 + $0x10] sm:$0xff] %v1580
        %1597 = vst [vmem:[#allocation4 + $0x18] sm:$0xff] %v1581
        %1598 = vst [vmem:[#allocation4 + $0x20] sm:$0xff] %v1582
        %1599 = vst [vmem:[#allocation4 + $0x28] sm:$0xff] %v1583
        %1600 = vst [vmem:[#allocation4 + $0x30] sm:$0xff] %v1584
        %1601 = vst [vmem:[#allocation4 + $0x38] sm:$0xff] %v1585
        %1602 = vst [vmem:[#allocation4 + $0x40] sm:$0xff] %v1586
        %1603 = vst [vmem:[#allocation4 + $0x48] sm:$0xff] %v1587
        %1604 = vst [vmem:[#allocation4 + $0x50] sm:$0xff] %v1588
        %1605 = vst [vmem:[#allocation4 + $0x58] sm:$0xff] %v1589
        %1606 = vst [vmem:[#allocation4 + $0x60] sm:$0xff] %v1590
        %1607 = vst [vmem:[#allocation4 + $0x68] sm:$0xff] %v1591
        %1608 = vst [vmem:[#allocation4 + $0x70] sm:$0xff] %v1592
        %1609 = vst [vmem:[#allocation4 + $0x78] sm:$0xff] %v1593
        %1610 = vst.msk [vmem:[#allocation2] sm:$0xff] %vm1196, %v860
        %1611 = vst.msk [vmem:[#allocation2 + $0x8] sm:$0xff] %vm1196, %v861
        %1612 = vst.msk [vmem:[#allocation2 + $0x10] sm:$0xff] %vm1196, %v862
        %1613 = vst.msk [vmem:[#allocation2 + $0x18] sm:$0xff] %vm1196, %v863
        %1614 = vst.msk [vmem:[#allocation2 + $0x20] sm:$0xff] %vm1196, %v864
        %1615 = vst.msk [vmem:[#allocation2 + $0x28] sm:$0xff] %vm1196, %v865
        %1616 = vst.msk [vmem:[#allocation2 + $0x30] sm:$0xff] %vm1196, %v866
        %1617 = vst.msk [vmem:[#allocation2 + $0x38] sm:$0xff] %vm1196, %v867
        %1618 = vst.msk [vmem:[#allocation2 + $0x40] sm:$0xff] %vm1196, %v868
        %1619 = vst.msk [vmem:[#allocation2 + $0x48] sm:$0xff] %vm1196, %v869
        %1620 = vst.msk [vmem:[#allocation2 + $0x50] sm:$0xff] %vm1196, %v870
        %1621 = vst.msk [vmem:[#allocation2 + $0x58] sm:$0xff] %vm1196, %v871
        %1622 = vst.msk [vmem:[#allocation2 + $0x60] sm:$0xff] %vm1196, %v872
        %1623 = vst.msk [vmem:[#allocation2 + $0x68] sm:$0xff] %vm1196, %v873
        %1624 = vst.msk [vmem:[#allocation2 + $0x70] sm:$0xff] %vm1196, %v874
        %1625 = vst.msk [vmem:[#allocation2 + $0x78] sm:$0xff] %vm1196, %v875
        %p1626 = scmp.eq.s32.totalorder %s34, 1
        // Predicated region
        $region57: #{tpu_custom_call.1} parent=35 // pred_check
          %p1627 = pneg %p1626
        $region58: #{tpu_custom_call.1} parent=35 // pred_check_branch
          %1629 = sbr.rel (%p1627) target = $region60
        $region59: #{tpu_custom_call.1} parent=35 // pred_region
          %v1630 = vld [vmem:[#allocation4] sm:$0xff]
          %v1631 = vld [vmem:[#allocation4 + $0x8] sm:$0xff]
          %v1632 = vld [vmem:[#allocation4 + $0x10] sm:$0xff]
          %v1633 = vld [vmem:[#allocation4 + $0x18] sm:$0xff]
          %v1634 = vld [vmem:[#allocation4 + $0x20] sm:$0xff]
          %v1635 = vld [vmem:[#allocation4 + $0x28] sm:$0xff]
          %v1636 = vld [vmem:[#allocation4 + $0x30] sm:$0xff]
          %v1637 = vld [vmem:[#allocation4 + $0x38] sm:$0xff]
          %v1638 = vld [vmem:[#allocation4 + $0x40] sm:$0xff]
          %v1639 = vld [vmem:[#allocation4 + $0x48] sm:$0xff]
          %v1640 = vld [vmem:[#allocation4 + $0x50] sm:$0xff]
          %v1641 = vld [vmem:[#allocation4 + $0x58] sm:$0xff]
          %v1642 = vld [vmem:[#allocation4 + $0x60] sm:$0xff]
          %v1643 = vld [vmem:[#allocation4 + $0x68] sm:$0xff]
          %v1644 = vld [vmem:[#allocation4 + $0x70] sm:$0xff]
          %v1645 = vld [vmem:[#allocation4 + $0x78] sm:$0xff]
          %v1646 = vld [vmem:[#allocation3] sm:$0xff]
          %v1647 = vld [vmem:[#allocation3 + $0x8] sm:$0xff]
          %v1648 = vld [vmem:[#allocation3 + $0x10] sm:$0xff]
          %v1649 = vld [vmem:[#allocation3 + $0x18] sm:$0xff]
          %v1650 = vld [vmem:[#allocation3 + $0x20] sm:$0xff]
          %v1651 = vld [vmem:[#allocation3 + $0x28] sm:$0xff]
          %v1652 = vld [vmem:[#allocation3 + $0x30] sm:$0xff]
          %v1653 = vld [vmem:[#allocation3 + $0x38] sm:$0xff]
          %v1654 = vld [vmem:[#allocation3 + $0x40] sm:$0xff]
          %v1655 = vld [vmem:[#allocation3 + $0x48] sm:$0xff]
          %v1656 = vld [vmem:[#allocation3 + $0x50] sm:$0xff]
          %v1657 = vld [vmem:[#allocation3 + $0x58] sm:$0xff]
          %v1658 = vld [vmem:[#allocation3 + $0x60] sm:$0xff]
          %v1659 = vld [vmem:[#allocation3 + $0x68] sm:$0xff]
          %v1660 = vld [vmem:[#allocation3 + $0x70] sm:$0xff]
          %v1661 = vld [vmem:[#allocation3 + $0x78] sm:$0xff]
          %1663 = vset.pattern.permute.xlu0 0
          %1664 = vperm.xlu0 %1663, %v1646
          %v1665 = vpop.permute.xlu0 %1664
          %1668 = vset.pattern.permute.xlu0 0
          %1669 = vperm.xlu0 %1668, %v1647
          %v1670 = vpop.permute.xlu0 %1669
          %1673 = vset.pattern.permute.xlu0 0
          %1674 = vperm.xlu0 %1673, %v1648
          %v1675 = vpop.permute.xlu0 %1674
          %1678 = vset.pattern.permute.xlu0 0
          %1679 = vperm.xlu0 %1678, %v1649
          %v1680 = vpop.permute.xlu0 %1679
          %1683 = vset.pattern.permute.xlu0 0
          %1684 = vperm.xlu0 %1683, %v1650
          %v1685 = vpop.permute.xlu0 %1684
          %1688 = vset.pattern.permute.xlu0 0
          %1689 = vperm.xlu0 %1688, %v1651
          %v1690 = vpop.permute.xlu0 %1689
          %1693 = vset.pattern.permute.xlu0 0
          %1694 = vperm.xlu0 %1693, %v1652
          %v1695 = vpop.permute.xlu0 %1694
          %1698 = vset.pattern.permute.xlu0 0
          %1699 = vperm.xlu0 %1698, %v1653
          %v1700 = vpop.permute.xlu0 %1699
          %1703 = vset.pattern.permute.xlu0 0
          %1704 = vperm.xlu0 %1703, %v1654
          %v1705 = vpop.permute.xlu0 %1704
          %1708 = vset.pattern.permute.xlu0 0
          %1709 = vperm.xlu0 %1708, %v1655
          %v1710 = vpop.permute.xlu0 %1709
          %1713 = vset.pattern.permute.xlu0 0
          %1714 = vperm.xlu0 %1713, %v1656
          %v1715 = vpop.permute.xlu0 %1714
          %1718 = vset.pattern.permute.xlu0 0
          %1719 = vperm.xlu0 %1718, %v1657
          %v1720 = vpop.permute.xlu0 %1719
          %1723 = vset.pattern.permute.xlu0 0
          %1724 = vperm.xlu0 %1723, %v1658
          %v1725 = vpop.permute.xlu0 %1724
          %1728 = vset.pattern.permute.xlu0 0
          %1729 = vperm.xlu0 %1728, %v1659
          %v1730 = vpop.permute.xlu0 %1729
          %1733 = vset.pattern.permute.xlu0 0
          %1734 = vperm.xlu0 %1733, %v1660
          %v1735 = vpop.permute.xlu0 %1734
          %1738 = vset.pattern.permute.xlu0 0
          %1739 = vperm.xlu0 %1738, %v1661
          %v1740 = vpop.permute.xlu0 %1739
          %v1742 = vrcp.pop %v1665
          %v1743 = vmul.f32 %v1630, %v1742
          %v1744 = vrcp.pop %v1670
          %v1745 = vmul.f32 %v1631, %v1744
          %v1746 = vrcp.pop %v1675
          %v1747 = vmul.f32 %v1632, %v1746
          %v1748 = vrcp.pop %v1680
          %v1749 = vmul.f32 %v1633, %v1748
          %v1750 = vrcp.pop %v1685
          %v1751 = vmul.f32 %v1634, %v1750
          %v1752 = vrcp.pop %v1690
          %v1753 = vmul.f32 %v1635, %v1752
          %v1754 = vrcp.pop %v1695
          %v1755 = vmul.f32 %v1636, %v1754
          %v1756 = vrcp.pop %v1700
          %v1757 = vmul.f32 %v1637, %v1756
          %v1758 = vrcp.pop %v1705
          %v1759 = vmul.f32 %v1638, %v1758
          %v1760 = vrcp.pop %v1710
          %v1761 = vmul.f32 %v1639, %v1760
          %v1762 = vrcp.pop %v1715
          %v1763 = vmul.f32 %v1640, %v1762
          %v1764 = vrcp.pop %v1720
          %v1765 = vmul.f32 %v1641, %v1764
          %v1766 = vrcp.pop %v1725
          %v1767 = vmul.f32 %v1642, %v1766
          %v1768 = vrcp.pop %v1730
          %v1769 = vmul.f32 %v1643, %v1768
          %v1770 = vrcp.pop %v1735
          %v1771 = vmul.f32 %v1644, %v1770
          %v1772 = vrcp.pop %v1740
          %v1773 = vmul.f32 %v1645, %v1772
          %1774 = vst [vmem:[%s367] sm:$0xff] %v1743
          %1775 = vst [vmem:[%s367 + $0x8] sm:$0xff] %v1745
          %1776 = vst [vmem:[%s367 + $0x10] sm:$0xff] %v1747
          %1777 = vst [vmem:[%s367 + $0x18] sm:$0xff] %v1749
          %1778 = vst [vmem:[%s367 + $0x20] sm:$0xff] %v1751
          %1779 = vst [vmem:[%s367 + $0x28] sm:$0xff] %v1753
          %1780 = vst [vmem:[%s367 + $0x30] sm:$0xff] %v1755
          %1781 = vst [vmem:[%s367 + $0x38] sm:$0xff] %v1757
          %1782 = vst [vmem:[%s367 + $0x40] sm:$0xff] %v1759
          %1783 = vst [vmem:[%s367 + $0x48] sm:$0xff] %v1761
          %1784 = vst [vmem:[%s367 + $0x50] sm:$0xff] %v1763
          %1785 = vst [vmem:[%s367 + $0x58] sm:$0xff] %v1765
          %1786 = vst [vmem:[%s367 + $0x60] sm:$0xff] %v1767
          %1787 = vst [vmem:[%s367 + $0x68] sm:$0xff] %v1769
          %1788 = vst [vmem:[%s367 + $0x70] sm:$0xff] %v1771
          %1789 = vst [vmem:[%s367 + $0x78] sm:$0xff] %v1773
        $region60: #{tpu_custom_call.1} parent=35 // pred_fallthru
          _
        %s1790 = sand.u32 %s168, 1
        %s1791 = scalar_lea.sflag [#allocation7], %s1790
        %s1792 = sand.u32 %s168, 1
        %s1793 = smul.addr %s1792, 128
        %s1794 = scalar_lea.vmem [#allocation13], %s1793
        // Predicated region
        $region61: #{tpu_custom_call.1} parent=35 // pred_check
          %p1795 = pneg %p178
        $region62: #{tpu_custom_call.1} parent=35 // pred_check_branch
          %1797 = sbr.rel (%p1795) target = $region64
        $region63: #{tpu_custom_call.1} parent=35 // pred_region
          %s1798 = smul.u32 16, %s33
          %s1800 = ssub.s32 2048, 2048
          %1801 = vsyncadd %s1791, %s1800
          %s1802 = smul.addr %s32, 32
          %s1803 = sadd.s32 %s1798, %s1802
          %s1804 = smul.addr %s1803, 128
          %s1805 = scalar_lea.hbm %s4, %s1804
          %s1806 = sshll.u32 %s1794, 4
          %s1807 = int_to_ptr.vmem [resolvable:$true] %s1806
          %1812 = dma.vmem_to_hbm [thread:$0]  %s1807, 2048, %s1805, %s1791, 128, 128, 8
        $region64: #{tpu_custom_call.1} parent=35 // pred_fallthru
          _
      $region36: #{tpu_custom_call.1} parent=5 // pred_fallthru
        _
      %p1813 = scmp.le.s32.totalorder 2, %s22
      // Predicated region
      $region65: #{tpu_custom_call.1} parent=5 // pred_check
        %p1814 = pneg %p1813
      $region66: #{tpu_custom_call.1} parent=5 // pred_check_branch
        %1816 = sbr.rel (%p1814) target = $region68
      $region67: #{tpu_custom_call.1} parent=5 // pred_region
        %s1817 = ssub.s32 %s22, 2
        // Predicated region
        $region69: #{tpu_custom_call.1} parent=67 // pred_check
          %p1818 = pneg %p184
        $region70: #{tpu_custom_call.1} parent=67 // pred_check_branch
          %1820 = sbr.rel (%p1818) target = $region72
        $region71: #{tpu_custom_call.1} parent=67 // pred_region
          %s1821 = sand.u32 %s169, 1
          %s1822 = scalar_lea.sflag [#allocation7], %s1821
          %s1823 = sand.u32 %s169, 1
          %s1824 = smul.addr %s1823, 128
          %s1825 = scalar_lea.vmem [#allocation13], %s1824
          %1826 = dma.done %s1822, 2048
        $region72: #{tpu_custom_call.1} parent=67 // pred_fallthru
          _
      $region68: #{tpu_custom_call.1} parent=5 // pred_fallthru
        _
    $region6: #{tpu_custom_call.1} parent=1 // loop_footer
      %s26 = sadd.s32 1, %s22
    $region7: #{tpu_custom_call.1} parent=1 // loop_footer_branch
      %21 = sbr.rel target = $region3
    $region8: #{tpu_custom_call.1} parent=1 // loop_exit
      _
    %1827 = vsyncpa [#allocation6], 1
    %s1828 = scalar_lea.sflag [#allocation6], 1
    %1829 = vsyncpa %s1828, 1
    %1830 = vsyncpa [#allocation9], 1
    %s1831 = scalar_lea.sflag [#allocation9], 1
    %1832 = vsyncpa %s1831, 1
    %1833 = vsyncpa [#allocation12], 1
    %s1834 = scalar_lea.sflag [#allocation12], 1
    %1835 = vsyncpa %s1834, 1
    %1836 = vsyncpa [#allocation7], 1
    %s1837 = scalar_lea.sflag [#allocation7], 1
    %1838 = vsyncpa %s1837, 1

</llo_original>
